<compile_context>
chip_gen: v7x
topology: tpu7x:2x2x1
jax: 0.10.0
libtpu: 0.0.40
codegen_flags: <defaults>
</compile_context>

<pallas_src>
import functools

import jax
import jax.numpy as jnp
import numpy as np
from jax.experimental import pallas as pl
from jax.experimental.pallas import tpu as pltpu

# SELU constants (match torch.nn.functional.selu)
_SELU_ALPHA = 1.6732632423543772
_SELU_SCALE = 1.0507009873554805

_NEG_PAD = -1e30  # bias value for padded logit columns; exp() underflows to 0.


def _selu(x):
    # scale * where(x > 0, x, alpha * (exp(x) - 1))
    return _SELU_SCALE * jnp.where(x > 0.0, x, _SELU_ALPHA * (jnp.exp(x) - 1.0))


def _amd_dnn_plus_kernel(x_ref, w1_ref, b1_ref, w2_ref, b2_ref, w3_ref, b3_ref,
                         out_ref, *, n_real_cols):
    """Fused MLP + SELU + row-max shift + last-class softmax prob, one batch tile.

    Matmuls run in the weights' dtype (bf16 by default) with f32 accumulation;
    bias-add, SELU, max-shift and softmax are done in f32.

    Output layout (lane-dense, Cp = out_ref.shape[-1] multiple of 128):
      columns [0, n_real_cols)   : max-shifted logits
      column  n_real_cols        : softmax(logits)[:, -1]
      remaining padded columns   : junk (sliced off by the wrapper)
    """
    mm_dtype = w1_ref.dtype

    x = x_ref[...]

    # Layer 1: Linear + SELU
    h1 = jnp.dot(x, w1_ref[...], preferred_element_type=jnp.float32) + b1_ref[...]
    h1 = _selu(h1).astype(mm_dtype)

    # Layer 2: Linear + SELU
    h2 = jnp.dot(h1, w2_ref[...], preferred_element_type=jnp.float32) + b2_ref[...]
    h2 = _selu(h2).astype(mm_dtype)

    # Dropout (p=0.6) is identity in eval mode.
    # Output layer: Linear -> logits over Cp columns (real classes + -1e30 pad)
    logits = jnp.dot(h2, w3_ref[...], preferred_element_type=jnp.float32) + b3_ref[...]

    # logits -= amax(logits, dim=-1, keepdim=True); padded columns never win.
    logits = logits - jnp.max(logits, axis=-1, keepdims=True)

    # Fused softmax(last class): padded columns are ~-1e30 -> exp == 0 exactly,
    # so summing all Cp lanes equals summing the real C classes.
    e = jnp.exp(logits)
    denom = jnp.sum(e, axis=-1, keepdims=True)
    col = jax.lax.broadcasted_iota(jnp.int32, logits.shape, 1)
    last_num = jnp.sum(jnp.where(col == n_real_cols - 1, e, 0.0),
                       axis=-1, keepdims=True)
    prob_last = last_num / denom

    # Pack prob_last into padded column `n_real_cols`; single unmasked store.
    out = jnp.where(col == n_real_cols, prob_last, logits)
    out_ref[...] = out.astype(out_ref.dtype)


@functools.partial(jax.jit, static_argnames=("tb", "matmul_dtype"))
def amd_dnn_plus_forward(x, w1, b1, w2, b2, w3, b3, *, tb=128,
                         matmul_dtype=jnp.bfloat16):
    """Returns (logits [B, n_classes+1], prob_of_last_class [B])."""
    B, D = x.shape
    H1 = w1.shape[1]
    H2 = w2.shape[1]
    C = w3.shape[1]
    # Lane-dense output width; column C holds the fused last-class probability.
    Cp = 128 * pl.cdiv(C + 1, 128)

    # Matmul operands in the MXU dtype; biases stay f32 (f32 accumulation).
    x_mm = x.astype(matmul_dtype)
    w1m = w1.astype(matmul_dtype)
    w2m = w2.astype(matmul_dtype)
    b1f = b1.astype(jnp.float32).reshape(1, H1)
    b2f = b2.astype(jnp.float32).reshape(1, H2)

    # Output-layer weights zero-padded / bias -1e30-padded to Cp columns so the
    # kernel's output tile is a full-width unmasked store and padded logits
    # never affect the row max or the softmax denominator.
    w3p = jnp.zeros((H2, Cp), matmul_dtype).at[:, :C].set(w3.astype(matmul_dtype))
    b3p = jnp.full((1, Cp), _NEG_PAD, jnp.float32).at[:, :C].set(
        b3.astype(jnp.float32).reshape(1, C))

    # Pad the batch to a multiple of the tile; padded rows are dropped below.
    n_tiles = pl.cdiv(B, tb)
    Bp = n_tiles * tb
    if Bp != B:
        x_mm = jnp.pad(x_mm, ((0, Bp - B), (0, 0)))

    full2d = lambda shape: pl.BlockSpec(shape, lambda i: (0, 0))

    out_p = pl.pallas_call(
        functools.partial(_amd_dnn_plus_kernel, n_real_cols=C),
        out_shape=jax.ShapeDtypeStruct((Bp, Cp), jnp.float32),
        grid_spec=pltpu.PrefetchScalarGridSpec(
            num_scalar_prefetch=0,
            grid=(n_tiles,),
            in_specs=[
                pl.BlockSpec((tb, D), lambda i: (i, 0)),   # x batch tile
                full2d((D, H1)),                           # w1 (resident)
                full2d((1, H1)),                           # b1
                full2d((H1, H2)),                          # w2
                full2d((1, H2)),                           # b2
                full2d((H2, Cp)),                          # w3 (padded, resident)
                full2d((1, Cp)),                           # b3 (padded)
            ],
            out_specs=pl.BlockSpec((tb, Cp), lambda i: (i, 0)),  # logits+prob slab
        ),
        compiler_params=pltpu.CompilerParams(
            # Batch tiles are independent -> shard across TensorCores on v7x.
            dimension_semantics=("parallel",),
        ),
    )(x_mm, w1m, b1f, w2m, b2f, w3p, b3p)

    out = out_p[:B]
    logits = out[:, :C]
    prob_last = out[:, C]
    return logits, prob_last


def _reference_forward(x, w1, b1, w2, b2, w3, b3):
    """Pure-JAX f32 reference mirroring the torch module's eval forward."""
    h1 = _selu(x @ w1 + b1)
    h2 = _selu(h1 @ w2 + b2)
    logits = h2 @ w3 + b3
    logits = logits - jnp.max(logits, axis=-1, keepdims=True)
    probs = jax.nn.softmax(logits, axis=-1)
    return logits, probs[:, -1]


if __name__ == "__main__":
    # Small deterministic setup consistent with the module:
    #   input_size = 128, dense_hidden_units = [200, 200], n_classes = 2
    #   -> output layer has n_classes + 1 = 3 units.
    # B = 200 is NOT a multiple of the batch tile (128): exercises the padding
    # path; padded grid has 2 steps (even -> both v7x TensorCores busy).
    B, D = 200, 128
    H1, H2 = 200, 200
    N_CLASSES = 2
    C = N_CLASSES + 1

    key = jax.random.PRNGKey(0)
    kx, k1, k2, k3, k4, k5, k6 = jax.random.split(key, 7)

    x = jax.random.normal(kx, (B, D), dtype=jnp.float32)
    w1 = jax.random.normal(k1, (D, H1), dtype=jnp.float32) * (1.0 / np.sqrt(D))
    b1 = jax.random.normal(k2, (1, H1), dtype=jnp.float32) * 0.01
    w2 = jax.random.normal(k3, (H1, H2), dtype=jnp.float32) * (1.0 / np.sqrt(H1))
    b2 = jax.random.normal(k4, (1, H2), dtype=jnp.float32) * 0.01
    w3 = jax.random.normal(k5, (H2, C), dtype=jnp.float32) * (1.0 / np.sqrt(H2))
    b3 = jax.random.normal(k6, (1, C), dtype=jnp.float32) * 0.01

    ref_logits, ref_prob = _reference_forward(x, w1, b1, w2, b2, w3, b3)

    # 1) Exact-parity f32 path.
    logits32, prob32 = amd_dnn_plus_forward(
        x, w1, b1, w2, b2, w3, b3, tb=128, matmul_dtype=jnp.float32)
    jax.block_until_ready((logits32, prob32))
    np.testing.assert_allclose(np.asarray(logits32), np.asarray(ref_logits),
                               rtol=1e-4, atol=1e-4)
    np.testing.assert_allclose(np.asarray(prob32), np.asarray(ref_prob),
                               rtol=1e-4, atol=1e-4)

    # 2) Default bf16-MXU path (looser tolerance: bf16 matmul inputs).
    logits_bf, prob_bf = amd_dnn_plus_forward(x, w1, b1, w2, b2, w3, b3, tb=128)
    jax.block_until_ready((logits_bf, prob_bf))
    np.testing.assert_allclose(np.asarray(logits_bf), np.asarray(ref_logits),
                               rtol=1e-1, atol=1e-1)
    np.testing.assert_allclose(np.asarray(prob_bf), np.asarray(ref_prob),
                               rtol=1e-1, atol=5e-2)

    print("KERNEL_OK")
</pallas_src>

<mosaic_0001>
module attributes {stable_mosaic.version = 11 : i64} {
  func.func @_amd_dnn_plus_kernel(%arg0: i32, %arg1: memref<128x128xf32, #tpu.memory_space<vmem>>, %arg2: memref<128x200xf32, #tpu.memory_space<vmem>>, %arg3: memref<1x200xf32, #tpu.memory_space<vmem>>, %arg4: memref<200x200xf32, #tpu.memory_space<vmem>>, %arg5: memref<1x200xf32, #tpu.memory_space<vmem>>, %arg6: memref<200x128xf32, #tpu.memory_space<vmem>>, %arg7: memref<1x128xf32, #tpu.memory_space<vmem>>, %arg8: memref<128x128xf32, #tpu.memory_space<vmem>>) attributes {dimension_semantics = [#tpu.dimension_semantics<parallel>], iteration_bounds = array<i64: 2>, scalar_prefetch = 0 : i64, scratch_operands = 0 : i64, tpu.core_type = #tpu.core_type<tc>, window_params = [{transform_indices = @transform_0, window_bounds = array<i64: 128, 128>}, {pipeline_mode = #tpu.pipeline_mode<synchronous>, transform_indices = @transform_1, window_bounds = array<i64: 128, 200>}, {pipeline_mode = #tpu.pipeline_mode<synchronous>, transform_indices = @transform_2, window_bounds = array<i64: 1, 200>}, {pipeline_mode = #tpu.pipeline_mode<synchronous>, transform_indices = @transform_3, window_bounds = array<i64: 200, 200>}, {pipeline_mode = #tpu.pipeline_mode<synchronous>, transform_indices = @transform_4, window_bounds = array<i64: 1, 200>}, {pipeline_mode = #tpu.pipeline_mode<synchronous>, transform_indices = @transform_5, window_bounds = array<i64: 200, 128>}, {pipeline_mode = #tpu.pipeline_mode<synchronous>, transform_indices = @transform_6, window_bounds = array<i64: 1, 128>}, {transform_indices = @transform_7, window_bounds = array<i64: 128, 128>}]} {
    %c0 = arith.constant 0 : index
    %c0_0 = arith.constant 0 : index
    %0 = vector.load %arg1[%c0, %c0_0] : memref<128x128xf32, #tpu.memory_space<vmem>>, vector<128x128xf32>
    %c0_1 = arith.constant 0 : index
    %c0_2 = arith.constant 0 : index
    %1 = vector.load %arg2[%c0_1, %c0_2] : memref<128x200xf32, #tpu.memory_space<vmem>>, vector<128x200xf32>
    %cst = arith.constant dense<0.000000e+00> : vector<128x200xf32>
    %2 = tpu.matmul %0, %1, %cst {dimension_numbers = #tpu.dot_dimension_numbers<[1], [0], [0], [1], [0, 0, 1, 1], [], []>} : vector<128x128xf32>, vector<128x200xf32>, vector<128x200xf32> -> vector<128x200xf32>
    %c0_3 = arith.constant 0 : index
    %c0_4 = arith.constant 0 : index
    %3 = vector.load %arg3[%c0_3, %c0_4] : memref<1x200xf32, #tpu.memory_space<vmem>>, vector<1x200xf32>
    %4 = vector.broadcast %3 : vector<1x200xf32> to vector<128x200xf32>
    %5 = arith.addf %2, %4 : vector<128x200xf32>
    %cst_5 = arith.constant 0.000000e+00 : f32
    %6 = vector.broadcast %cst_5 : f32 to vector<128x200xf32>
    %7 = arith.cmpf ogt, %5, %6 : vector<128x200xf32>
    %8 = math.exp %5 : vector<128x200xf32>
    %cst_6 = arith.constant 1.000000e+00 : f32
    %9 = vector.broadcast %cst_6 : f32 to vector<128x200xf32>
    %10 = arith.subf %8, %9 : vector<128x200xf32>
    %cst_7 = arith.constant 1.67326319 : f32
    %11 = vector.broadcast %cst_7 : f32 to vector<128x200xf32>
    %12 = arith.mulf %11, %10 : vector<128x200xf32>
    %13 = arith.select %7, %5, %12 : vector<128x200xi1>, vector<128x200xf32>
    %cst_8 = arith.constant 1.05070102 : f32
    %14 = vector.broadcast %cst_8 : f32 to vector<128x200xf32>
    %15 = arith.mulf %14, %13 : vector<128x200xf32>
    %c0_9 = arith.constant 0 : index
    %c0_10 = arith.constant 0 : index
    %16 = vector.load %arg4[%c0_9, %c0_10] : memref<200x200xf32, #tpu.memory_space<vmem>>, vector<200x200xf32>
    %cst_11 = arith.constant dense<0.000000e+00> : vector<128x200xf32>
    %17 = tpu.matmul %15, %16, %cst_11 {dimension_numbers = #tpu.dot_dimension_numbers<[1], [0], [0], [1], [0, 0, 1, 1], [], []>} : vector<128x200xf32>, vector<200x200xf32>, vector<128x200xf32> -> vector<128x200xf32>
    %c0_12 = arith.constant 0 : index
    %c0_13 = arith.constant 0 : index
    %18 = vector.load %arg5[%c0_12, %c0_13] : memref<1x200xf32, #tpu.memory_space<vmem>>, vector<1x200xf32>
    %19 = vector.broadcast %18 : vector<1x200xf32> to vector<128x200xf32>
    %20 = arith.addf %17, %19 : vector<128x200xf32>
    %cst_14 = arith.constant 0.000000e+00 : f32
    %21 = vector.broadcast %cst_14 : f32 to vector<128x200xf32>
    %22 = arith.cmpf ogt, %20, %21 : vector<128x200xf32>
    %23 = math.exp %20 : vector<128x200xf32>
    %cst_15 = arith.constant 1.000000e+00 : f32
    %24 = vector.broadcast %cst_15 : f32 to vector<128x200xf32>
    %25 = arith.subf %23, %24 : vector<128x200xf32>
    %cst_16 = arith.constant 1.67326319 : f32
    %26 = vector.broadcast %cst_16 : f32 to vector<128x200xf32>
    %27 = arith.mulf %26, %25 : vector<128x200xf32>
    %28 = arith.select %22, %20, %27 : vector<128x200xi1>, vector<128x200xf32>
    %cst_17 = arith.constant 1.05070102 : f32
    %29 = vector.broadcast %cst_17 : f32 to vector<128x200xf32>
    %30 = arith.mulf %29, %28 : vector<128x200xf32>
    %c0_18 = arith.constant 0 : index
    %c0_19 = arith.constant 0 : index
    %31 = vector.load %arg6[%c0_18, %c0_19] : memref<200x128xf32, #tpu.memory_space<vmem>>, vector<200x128xf32>
    %cst_20 = arith.constant dense<0.000000e+00> : vector<128x128xf32>
    %32 = tpu.matmul %30, %31, %cst_20 {dimension_numbers = #tpu.dot_dimension_numbers<[1], [0], [0], [1], [0, 0, 1, 1], [], []>} : vector<128x200xf32>, vector<200x128xf32>, vector<128x128xf32> -> vector<128x128xf32>
    %c0_21 = arith.constant 0 : index
    %c0_22 = arith.constant 0 : index
    %33 = vector.load %arg7[%c0_21, %c0_22] : memref<1x128xf32, #tpu.memory_space<vmem>>, vector<1x128xf32>
    %34 = vector.broadcast %33 : vector<1x128xf32> to vector<128x128xf32>
    %35 = arith.addf %32, %34 : vector<128x128xf32>
    %cst_23 = arith.constant dense<0xFF800000> : vector<128xf32>
    %36 = vector.multi_reduction <maximumf>, %35, %cst_23 [1] : vector<128x128xf32> to vector<128xf32>
    %37 = vector.shape_cast %36 : vector<128xf32> to vector<128x1xf32>
    %38 = vector.broadcast %37 : vector<128x1xf32> to vector<128x128xf32>
    %39 = arith.subf %35, %38 : vector<128x128xf32>
    %40 = math.exp %39 : vector<128x128xf32>
    %cst_24 = arith.constant dense<0.000000e+00> : vector<128xf32>
    %41 = vector.multi_reduction <add>, %40, %cst_24 [1] : vector<128x128xf32> to vector<128xf32>
    %42 = vector.shape_cast %41 : vector<128xf32> to vector<128x1xf32>
    %43 = tpu.iota {dimensions = array<i32: 1>} : vector<128x128xi32>
    %c2_i32 = arith.constant 2 : i32
    %44 = vector.broadcast %c2_i32 : i32 to vector<128x128xi32>
    %45 = arith.cmpi eq, %43, %44 : vector<128x128xi32>
    %cst_25 = arith.constant 0.000000e+00 : f32
    %46 = vector.broadcast %cst_25 : f32 to vector<128x128xf32>
    %47 = arith.select %45, %40, %46 : vector<128x128xi1>, vector<128x128xf32>
    %cst_26 = arith.constant dense<0.000000e+00> : vector<128xf32>
    %48 = vector.multi_reduction <add>, %47, %cst_26 [1] : vector<128x128xf32> to vector<128xf32>
    %49 = vector.shape_cast %48 : vector<128xf32> to vector<128x1xf32>
    %50 = arith.divf %49, %42 : vector<128x1xf32>
    %c3_i32 = arith.constant 3 : i32
    %51 = vector.broadcast %c3_i32 : i32 to vector<128x128xi32>
    %52 = arith.cmpi eq, %43, %51 : vector<128x128xi32>
    %53 = vector.shape_cast %50 : vector<128x1xf32> to vector<128x1xf32>
    %54 = vector.broadcast %53 : vector<128x1xf32> to vector<128x128xf32>
    %55 = arith.select %52, %54, %39 : vector<128x128xi1>, vector<128x128xf32>
    %c0_27 = arith.constant 0 : index
    %c0_28 = arith.constant 0 : index
    %56 = vector.load %arg8[%c0_27, %c0_28] : memref<128x128xf32, #tpu.memory_space<vmem>>, vector<128x128xf32>
    tpu.vector_store %arg8[%c0_27, %c0_28], %55 {strides = array<i32>} : memref<128x128xf32, #tpu.memory_space<vmem>>, vector<128x128xf32>,
    return
  }
  func.func @transform_0(%arg0: i32) -> (i32, i32) {
    %c0_i32 = arith.constant 0 : i32
    %c0_i32_0 = arith.constant 0 : i32
    return %arg0, %c0_i32 : i32, i32
  }
  func.func @transform_1(%arg0: i32) -> (i32, i32) {
    %c0_i32 = arith.constant 0 : i32
    %c0_i32_0 = arith.constant 0 : i32
    %c0_i32_1 = arith.constant 0 : i32
    return %c0_i32, %c0_i32_0 : i32, i32
  }
  func.func @transform_2(%arg0: i32) -> (i32, i32) {
    %c0_i32 = arith.constant 0 : i32
    %c0_i32_0 = arith.constant 0 : i32
    %c0_i32_1 = arith.constant 0 : i32
    return %c0_i32, %c0_i32_0 : i32, i32
  }
  func.func @transform_3(%arg0: i32) -> (i32, i32) {
    %c0_i32 = arith.constant 0 : i32
    %c0_i32_0 = arith.constant 0 : i32
    %c0_i32_1 = arith.constant 0 : i32
    return %c0_i32, %c0_i32_0 : i32, i32
  }
  func.func @transform_4(%arg0: i32) -> (i32, i32) {
    %c0_i32 = arith.constant 0 : i32
    %c0_i32_0 = arith.constant 0 : i32
    %c0_i32_1 = arith.constant 0 : i32
    return %c0_i32, %c0_i32_0 : i32, i32
  }
  func.func @transform_5(%arg0: i32) -> (i32, i32) {
    %c0_i32 = arith.constant 0 : i32
    %c0_i32_0 = arith.constant 0 : i32
    %c0_i32_1 = arith.constant 0 : i32
    return %c0_i32, %c0_i32_0 : i32, i32
  }
  func.func @transform_6(%arg0: i32) -> (i32, i32) {
    %c0_i32 = arith.constant 0 : i32
    %c0_i32_0 = arith.constant 0 : i32
    %c0_i32_1 = arith.constant 0 : i32
    return %c0_i32, %c0_i32_0 : i32, i32
  }
  func.func @transform_7(%arg0: i32) -> (i32, i32) {
    %c0_i32 = arith.constant 0 : i32
    %c0_i32_0 = arith.constant 0 : i32
    return %arg0, %c0_i32 : i32, i32
  }
}

</mosaic_0001>

<llo_original>
// kernel: amd_dnn_plus_forward.1
$region0: #{amd_dnn_plus_forward.1}
  #allocation0 [shape = 'u32[]', space=smem, size = 0x4, offset = 0x4, fixed_abs, tag = 'smem constant byte address 0x4 - core index']
  #allocation1 [shape = 'u32[144,128]{1,0:T(1,128)}', space=vmem, size = 0x12000, scoped, tag = 'internal scratch']
  %s0 = inlined_call_operand.vmem [shape: f32[256,128], index: 0, kind: input, shape index: {}]
  %s1 = inlined_call_operand.vmem [shape: f32[128,200], index: 1, kind: input, shape index: {}]
  %s2 = inlined_call_operand.vmem [shape: f32[1,200], index: 2, kind: input, shape index: {}]
  %s3 = inlined_call_operand.vmem [shape: f32[200,200], index: 3, kind: input, shape index: {}]
  %s4 = inlined_call_operand.vmem [shape: f32[1,200], index: 4, kind: input, shape index: {}]
  %s5 = inlined_call_operand.vmem [shape: f32[200,128], index: 5, kind: input, shape index: {}]
  %s6 = inlined_call_operand.vmem [shape: f32[1,128], index: 6, kind: input, shape index: {}]
  %s7 = inlined_call_operand.vmem [shape: f32[256,128], index: 7, kind: output, shape index: {}]
  %s8 = sld [smem:[#allocation0]]
  $region61: #{amd_dnn_plus_forward.1} parent=0
    _
  %s10 = ssub.s32 1, %s8
  %s11 = scalar_select 0, %s10, %s8
  loop: start=0, step=1, limit=4
  $region2: #{amd_dnn_plus_forward.1} parent=0 // loop_pre_header
    _
  $region3: #{amd_dnn_plus_forward.1} parent=0 // loop_header
    %s13 = sphi 0, %s17
    %p14 = scmp.ge.s32.totalorder %s13, 4
    %s23 = sphi 0, %s25
    %s26 = sphi 0, %s23
    %s27 = sphi 0, %s26
    %s43 = sphi 0, %s27
    %s47 = sphi 0, %s47
    %s49 = sphi 0, %s47
    %s50 = sphi 0, %s49
    %s64 = sphi 0, %s50
    %s68 = sphi 0, %s68
    %s70 = sphi 0, %s68
    %s71 = sphi 0, %s70
    %s85 = sphi 0, %s71
    %s89 = sphi 0, %s89
    %s91 = sphi 0, %s89
    %s92 = sphi 0, %s91
    %s106 = sphi 0, %s92
    %s110 = sphi 0, %s110
    %s112 = sphi 0, %s110
    %s113 = sphi 0, %s112
    %s127 = sphi 0, %s113
    %s131 = sphi 0, %s131
    %s133 = sphi 0, %s131
    %s134 = sphi 0, %s133
    %s148 = sphi 0, %s134
    %s152 = sphi 0, %s152
    %s154 = sphi 0, %s152
    %s155 = sphi 0, %s154
    %s169 = sphi 0, %s155
    %s175 = sphi 0, %s177
    %s178 = sphi 0, %s175
    %s179 = sphi 0, %s178
    %s195 = sphi 0, %s179
  $region4: #{amd_dnn_plus_forward.1} parent=0 // loop_header_branch
    %16 = sbr.rel (%p14) target = $region8
  $region5: #{amd_dnn_plus_forward.1} parent=0 // loop_body
    %s18 = ssub.s32 %s13, 1
    %s19 = ssub.s32 %s13, 2
    %s20 = sadd.s32 %s13, 1
    %s21 = ssub.s32 %s13, %s20
    %p22 = scmp.eq.s32.totalorder %s21, 0
    %s24 = sadd.s32 %s23, 1
    %s25 = scalar_select %p22, %s23, %s24
    %p28 = pneg %p22
    %p29 = scmp.eq.s32.totalorder %s13, 1
    %p30 = por %p28, %p29
    %p31 = scmp.ne.s32.totalorder %s23, %s26
    %p32 = scmp.eq.s32.totalorder %s13, 0
    %p33 = por %p31, %p32
    %p34 = scmp.ne.s32.totalorder %s23, %s26
    %p35 = scmp.eq.s32.totalorder %s18, 1
    %p36 = por %p34, %p35
    %p37 = scmp.ne.s32.totalorder %s26, %s27
    %p38 = scmp.eq.s32.totalorder %s18, 0
    %p39 = por %p37, %p38
    %p40 = scmp.ne.s32.totalorder %s26, %s27
    %p41 = scmp.eq.s32.totalorder %s19, 1
    %p42 = por %p40, %p41
    %p44 = scmp.ne.s32.totalorder %s27, %s43
    %p45 = scmp.eq.s32.totalorder %s19, 0
    %p46 = por %p44, %p45
    %s48 = sadd.s32 %s47, 1
    %p51 = scmp.eq.s32.totalorder %s13, 1
    %p52 = scmp.ne.s32.totalorder %s47, %s49
    %p53 = scmp.eq.s32.totalorder %s13, 0
    %p54 = por %p52, %p53
    %p55 = scmp.ne.s32.totalorder %s47, %s49
    %p56 = scmp.eq.s32.totalorder %s18, 1
    %p57 = por %p55, %p56
    %p58 = scmp.ne.s32.totalorder %s49, %s50
    %p59 = scmp.eq.s32.totalorder %s18, 0
    %p60 = por %p58, %p59
    %p61 = scmp.ne.s32.totalorder %s49, %s50
    %p62 = scmp.eq.s32.totalorder %s19, 1
    %p63 = por %p61, %p62
    %p65 = scmp.ne.s32.totalorder %s50, %s64
    %p66 = scmp.eq.s32.totalorder %s19, 0
    %p67 = por %p65, %p66
    %s69 = sadd.s32 %s68, 1
    %p72 = scmp.eq.s32.totalorder %s13, 1
    %p73 = scmp.ne.s32.totalorder %s68, %s70
    %p74 = scmp.eq.s32.totalorder %s13, 0
    %p75 = por %p73, %p74
    %p76 = scmp.ne.s32.totalorder %s68, %s70
    %p77 = scmp.eq.s32.totalorder %s18, 1
    %p78 = por %p76, %p77
    %p79 = scmp.ne.s32.totalorder %s70, %s71
    %p80 = scmp.eq.s32.totalorder %s18, 0
    %p81 = por %p79, %p80
    %p82 = scmp.ne.s32.totalorder %s70, %s71
    %p83 = scmp.eq.s32.totalorder %s19, 1
    %p84 = por %p82, %p83
    %p86 = scmp.ne.s32.totalorder %s71, %s85
    %p87 = scmp.eq.s32.totalorder %s19, 0
    %p88 = por %p86, %p87
    %s90 = sadd.s32 %s89, 1
    %p93 = scmp.eq.s32.totalorder %s13, 1
    %p94 = scmp.ne.s32.totalorder %s89, %s91
    %p95 = scmp.eq.s32.totalorder %s13, 0
    %p96 = por %p94, %p95
    %p97 = scmp.ne.s32.totalorder %s89, %s91
    %p98 = scmp.eq.s32.totalorder %s18, 1
    %p99 = por %p97, %p98
    %p100 = scmp.ne.s32.totalorder %s91, %s92
    %p101 = scmp.eq.s32.totalorder %s18, 0
    %p102 = por %p100, %p101
    %p103 = scmp.ne.s32.totalorder %s91, %s92
    %p104 = scmp.eq.s32.totalorder %s19, 1
    %p105 = por %p103, %p104
    %p107 = scmp.ne.s32.totalorder %s92, %s106
    %p108 = scmp.eq.s32.totalorder %s19, 0
    %p109 = por %p107, %p108
    %s111 = sadd.s32 %s110, 1
    %p114 = scmp.eq.s32.totalorder %s13, 1
    %p115 = scmp.ne.s32.totalorder %s110, %s112
    %p116 = scmp.eq.s32.totalorder %s13, 0
    %p117 = por %p115, %p116
    %p118 = scmp.ne.s32.totalorder %s110, %s112
    %p119 = scmp.eq.s32.totalorder %s18, 1
    %p120 = por %p118, %p119
    %p121 = scmp.ne.s32.totalorder %s112, %s113
    %p122 = scmp.eq.s32.totalorder %s18, 0
    %p123 = por %p121, %p122
    %p124 = scmp.ne.s32.totalorder %s112, %s113
    %p125 = scmp.eq.s32.totalorder %s19, 1
    %p126 = por %p124, %p125
    %p128 = scmp.ne.s32.totalorder %s113, %s127
    %p129 = scmp.eq.s32.totalorder %s19, 0
    %p130 = por %p128, %p129
    %s132 = sadd.s32 %s131, 1
    %p135 = scmp.eq.s32.totalorder %s13, 1
    %p136 = scmp.ne.s32.totalorder %s131, %s133
    %p137 = scmp.eq.s32.totalorder %s13, 0
    %p138 = por %p136, %p137
    %p139 = scmp.ne.s32.totalorder %s131, %s133
    %p140 = scmp.eq.s32.totalorder %s18, 1
    %p141 = por %p139, %p140
    %p142 = scmp.ne.s32.totalorder %s133, %s134
    %p143 = scmp.eq.s32.totalorder %s18, 0
    %p144 = por %p142, %p143
    %p145 = scmp.ne.s32.totalorder %s133, %s134
    %p146 = scmp.eq.s32.totalorder %s19, 1
    %p147 = por %p145, %p146
    %p149 = scmp.ne.s32.totalorder %s134, %s148
    %p150 = scmp.eq.s32.totalorder %s19, 0
    %p151 = por %p149, %p150
    %s153 = sadd.s32 %s152, 1
    %p156 = scmp.eq.s32.totalorder %s13, 1
    %p157 = scmp.ne.s32.totalorder %s152, %s154
    %p158 = scmp.eq.s32.totalorder %s13, 0
    %p159 = por %p157, %p158
    %p160 = scmp.ne.s32.totalorder %s152, %s154
    %p161 = scmp.eq.s32.totalorder %s18, 1
    %p162 = por %p160, %p161
    %p163 = scmp.ne.s32.totalorder %s154, %s155
    %p164 = scmp.eq.s32.totalorder %s18, 0
    %p165 = por %p163, %p164
    %p166 = scmp.ne.s32.totalorder %s154, %s155
    %p167 = scmp.eq.s32.totalorder %s19, 1
    %p168 = por %p166, %p167
    %p170 = scmp.ne.s32.totalorder %s155, %s169
    %p171 = scmp.eq.s32.totalorder %s19, 0
    %p172 = por %p170, %p171
    %s173 = ssub.s32 %s13, %s20
    %p174 = scmp.eq.s32.totalorder %s173, 0
    %s176 = sadd.s32 %s175, 1
    %s177 = scalar_select %p174, %s175, %s176
    %p180 = pneg %p174
    %p181 = scmp.eq.s32.totalorder %s13, 1
    %p182 = por %p180, %p181
    %p183 = scmp.ne.s32.totalorder %s175, %s178
    %p184 = scmp.eq.s32.totalorder %s13, 0
    %p185 = por %p183, %p184
    %p186 = scmp.ne.s32.totalorder %s175, %s178
    %p187 = scmp.eq.s32.totalorder %s18, 1
    %p188 = por %p186, %p187
    %p189 = scmp.ne.s32.totalorder %s178, %s179
    %p190 = scmp.eq.s32.totalorder %s18, 0
    %p191 = por %p189, %p190
    %p192 = scmp.ne.s32.totalorder %s178, %s179
    %p193 = scmp.eq.s32.totalorder %s19, 1
    %p194 = por %p192, %p193
    %p196 = scmp.ne.s32.totalorder %s179, %s195
    %p197 = scmp.eq.s32.totalorder %s19, 0
    %p198 = por %p196, %p197
    %p199 = scmp.le.s32.totalorder 1, %s13
    %p200 = scmp.lt.s32.totalorder %s13, 3
    %p201 = pnand %p199, %p200
    %p202 = pneg %p201
    // Predicated region
    $region9: #{amd_dnn_plus_forward.1} parent=5 // pred_check
      _
    $region10: #{amd_dnn_plus_forward.1} parent=5 // pred_check_branch
      %204 = sbr.rel (%p201) target = $region12
    $region11: #{amd_dnn_plus_forward.1} parent=5 // pred_region
      %s205 = ssub.s32 %s13, 1
      // Predicated region
      $region13: #{amd_dnn_plus_forward.1} parent=11 // pred_check
        %p206 = pneg %p60
      $region14: #{amd_dnn_plus_forward.1} parent=11 // pred_check_branch
        %208 = sbr.rel (%p206) target = $region16
      $region15: #{amd_dnn_plus_forward.1} parent=11 // pred_region
        _
      $region16: #{amd_dnn_plus_forward.1} parent=11 // pred_fallthru
        _
      // Predicated region
      $region17: #{amd_dnn_plus_forward.1} parent=11 // pred_check
        %p209 = pneg %p81
      $region18: #{amd_dnn_plus_forward.1} parent=11 // pred_check_branch
        %211 = sbr.rel (%p209) target = $region20
      $region19: #{amd_dnn_plus_forward.1} parent=11 // pred_region
        _
      $region20: #{amd_dnn_plus_forward.1} parent=11 // pred_fallthru
        _
      // Predicated region
      $region21: #{amd_dnn_plus_forward.1} parent=11 // pred_check
        %p212 = pneg %p102
      $region22: #{amd_dnn_plus_forward.1} parent=11 // pred_check_branch
        %214 = sbr.rel (%p212) target = $region24
      $region23: #{amd_dnn_plus_forward.1} parent=11 // pred_region
        _
      $region24: #{amd_dnn_plus_forward.1} parent=11 // pred_fallthru
        _
      // Predicated region
      $region25: #{amd_dnn_plus_forward.1} parent=11 // pred_check
        %p215 = pneg %p123
      $region26: #{amd_dnn_plus_forward.1} parent=11 // pred_check_branch
        %217 = sbr.rel (%p215) target = $region28
      $region27: #{amd_dnn_plus_forward.1} parent=11 // pred_region
        _
      $region28: #{amd_dnn_plus_forward.1} parent=11 // pred_fallthru
        _
      // Predicated region
      $region29: #{amd_dnn_plus_forward.1} parent=11 // pred_check
        %p218 = pneg %p144
      $region30: #{amd_dnn_plus_forward.1} parent=11 // pred_check_branch
        %220 = sbr.rel (%p218) target = $region32
      $region31: #{amd_dnn_plus_forward.1} parent=11 // pred_region
        _
      $region32: #{amd_dnn_plus_forward.1} parent=11 // pred_fallthru
        _
      // Predicated region
      $region33: #{amd_dnn_plus_forward.1} parent=11 // pred_check
        %p221 = pneg %p165
      $region34: #{amd_dnn_plus_forward.1} parent=11 // pred_check_branch
        %223 = sbr.rel (%p221) target = $region36
      $region35: #{amd_dnn_plus_forward.1} parent=11 // pred_region
        _
      $region36: #{amd_dnn_plus_forward.1} parent=11 // pred_fallthru
        _
    $region12: #{amd_dnn_plus_forward.1} parent=5 // pred_fallthru
      _
    %p224 = scmp.lt.s32.totalorder %s13, 2
    // Predicated region
    $region37: #{amd_dnn_plus_forward.1} parent=5 // pred_check
      %p225 = pneg %p224
    $region38: #{amd_dnn_plus_forward.1} parent=5 // pred_check_branch
      %227 = sbr.rel (%p225) target = $region40
    $region39: #{amd_dnn_plus_forward.1} parent=5 // pred_region
      // Predicated region
      $region41: #{amd_dnn_plus_forward.1} parent=39 // pred_check
        %p228 = pneg %p33
      $region42: #{amd_dnn_plus_forward.1} parent=39 // pred_check_branch
        %230 = sbr.rel (%p228) target = $region44
      $region43: #{amd_dnn_plus_forward.1} parent=39 // pred_region
        %s231 = smul.u32 16, %s13
        %p232 = scmp.lt.s32.totalorder %s231, 31
        %s233 = scalar_select %p232, %s231, 31
        %s234 = smul.addr %s233, 8
        %s235 = scalar_lea.vmem %s0, %s234
        %s236 = smul.u32 16, %s13
      $region44: #{amd_dnn_plus_forward.1} parent=39 // pred_fallthru
        _
    $region40: #{amd_dnn_plus_forward.1} parent=5 // pred_fallthru
      _
    %p237 = scmp.le.s32.totalorder 1, %s13
    %p238 = scmp.lt.s32.totalorder %s13, 3
    %p239 = pnand %p237, %p238
    %p240 = pneg %p239
    // Predicated region
    $region45: #{amd_dnn_plus_forward.1} parent=5 // pred_check
      _
    $region46: #{amd_dnn_plus_forward.1} parent=5 // pred_check_branch
      %242 = sbr.rel (%p239) target = $region48
    $region47: #{amd_dnn_plus_forward.1} parent=5 // pred_region
      %s243 = ssub.s32 %s13, 1
      %s244 = smul.u32 16, %s18
      %p245 = scmp.lt.s32.totalorder %s244, 31
      %s246 = scalar_select %p245, %s244, 31
      %s247 = smul.addr %s246, 8
      %s248 = scalar_lea.vmem %s0, %s247
      %p249 = pneg %p39
      %p250 = pneg %p36
      %p251 = pneg %p60
      %p252 = pneg %p57
      %p253 = pneg %p81
      %p254 = pneg %p78
      %p255 = pneg %p102
      %p256 = pneg %p99
      %p257 = pneg %p123
      %p258 = pneg %p120
      %p259 = pneg %p144
      %p260 = pneg %p141
      %p261 = pneg %p165
      %p262 = pneg %p162
      %p263 = pneg %p191
      %p264 = pneg %p188
      %s265 = smul.u32 16, %s18
      %p266 = scmp.lt.s32.totalorder %s265, 31
      %s267 = scalar_select %p266, %s265, 31
      %s268 = smul.addr %s267, 8
      %s269 = scalar_lea.vmem %s7, %s268
      %s270 = smul.u32 16, %s18
      %p271 = scmp.lt.s32.totalorder %s270, 31
      %s272 = scalar_select %p271, %s270, 31
      %s273 = smul.addr %s272, 8
      %s274 = scalar_lea.vmem %s0, %s273
      %s275 = smul.u32 16, %s18
      %s276 = smul.u32 16, %s18
      %p277 = scmp.lt.s32.totalorder %s276, 31
      %s278 = scalar_select %p277, %s276, 31
      %s279 = smul.addr %s278, 8
      %s280 = scalar_lea.vmem %s7, %s279
      %s281 = smul.u32 16, %s18
      %v282 = vld [vmem:[%s274] sm:$0xff]
      %v283 = vld [vmem:[%s274 + $0x8] sm:$0xff]
      %v284 = vld [vmem:[%s274 + $0x10] sm:$0xff]
      %v285 = vld [vmem:[%s274 + $0x18] sm:$0xff]
      %v286 = vld [vmem:[%s274 + $0x20] sm:$0xff]
      %v287 = vld [vmem:[%s274 + $0x28] sm:$0xff]
      %v288 = vld [vmem:[%s274 + $0x30] sm:$0xff]
      %v289 = vld [vmem:[%s274 + $0x38] sm:$0xff]
      %v290 = vld [vmem:[%s274 + $0x40] sm:$0xff]
      %v291 = vld [vmem:[%s274 + $0x48] sm:$0xff]
      %v292 = vld [vmem:[%s274 + $0x50] sm:$0xff]
      %v293 = vld [vmem:[%s274 + $0x58] sm:$0xff]
      %v294 = vld [vmem:[%s274 + $0x60] sm:$0xff]
      %v295 = vld [vmem:[%s274 + $0x68] sm:$0xff]
      %v296 = vld [vmem:[%s274 + $0x70] sm:$0xff]
      %v297 = vld [vmem:[%s274 + $0x78] sm:$0xff]
      %v298 = vld [vmem:[%s1] sm:$0xff]
      %v299 = vld [vmem:[%s1 + $0x8] sm:$0xff]
      %v300 = vld [vmem:[%s1 + $0x10] sm:$0xff]
      %v301 = vld [vmem:[%s1 + $0x18] sm:$0xff]
      %v302 = vld [vmem:[%s1 + $0x20] sm:$0xff]
      %v303 = vld [vmem:[%s1 + $0x28] sm:$0xff]
      %v304 = vld [vmem:[%s1 + $0x30] sm:$0xff]
      %v305 = vld [vmem:[%s1 + $0x38] sm:$0xff]
      %v306 = vld [vmem:[%s1 + $0x40] sm:$0xff]
      %v307 = vld [vmem:[%s1 + $0x48] sm:$0xff]
      %v308 = vld [vmem:[%s1 + $0x50] sm:$0xff]
      %v309 = vld [vmem:[%s1 + $0x58] sm:$0xff]
      %v310 = vld [vmem:[%s1 + $0x60] sm:$0xff]
      %v311 = vld [vmem:[%s1 + $0x68] sm:$0xff]
      %v312 = vld [vmem:[%s1 + $0x70] sm:$0xff]
      %v313 = vld [vmem:[%s1 + $0x78] sm:$0xff]
      %v314 = vld [vmem:[%s1 + $0x80] sm:$0xff]
      %v315 = vld [vmem:[%s1 + $0x88] sm:$0xff]
      %v316 = vld [vmem:[%s1 + $0x90] sm:$0xff]
      %v317 = vld [vmem:[%s1 + $0x98] sm:$0xff]
      %v318 = vld [vmem:[%s1 + $0xa0] sm:$0xff]
      %v319 = vld [vmem:[%s1 + $0xa8] sm:$0xff]
      %v320 = vld [vmem:[%s1 + $0xb0] sm:$0xff]
      %v321 = vld [vmem:[%s1 + $0xb8] sm:$0xff]
      %v322 = vld [vmem:[%s1 + $0xc0] sm:$0xff]
      %v323 = vld [vmem:[%s1 + $0xc8] sm:$0xff]
      %v324 = vld [vmem:[%s1 + $0xd0] sm:$0xff]
      %v325 = vld [vmem:[%s1 + $0xd8] sm:$0xff]
      %v326 = vld [vmem:[%s1 + $0xe0] sm:$0xff]
      %v327 = vld [vmem:[%s1 + $0xe8] sm:$0xff]
      %v328 = vld [vmem:[%s1 + $0xf0] sm:$0xff]
      %v329 = vld [vmem:[%s1 + $0xf8] sm:$0xff]
      %v330 = vld [vmem:[%s2] sm:$0x3]
      %v332 = vlaneseq
      %v333 = vshrl.u32 %v332, 7
      %v334 = vsub.s32 0, %v333
      %v335 = vrot.slane %v330, %v334
      %v336 = vlaneseq
      %v337 = vshrl.u32 %v336, 7
      %v338 = vsub.s32 1, %v337
      %v339 = vrot.slane %v330, %v338
      %342 = vmatprep.subr.mxu0 %v299
      %343 = vmatpush1.msra.mxu0 %v298
      %344 = vmatprep.subr.mxu0 %v301
      %345 = vmatpush1.msra.mxu0 %v300
      %346 = vmatprep.subr.mxu0 %v303
      %347 = vmatpush1.msra.mxu0 %v302
      %348 = vmatprep.subr.mxu0 %v305
      %349 = vmatpush1.msra.mxu0 %v304
      %350 = vmatprep.subr.mxu0 %v307
      %351 = vmatpush1.msra.mxu0 %v306
      %352 = vmatprep.subr.mxu0 %v309
      %353 = vmatpush1.msra.mxu0 %v308
      %354 = vmatprep.subr.mxu0 %v311
      %355 = vmatpush1.msra.mxu0 %v310
      %356 = vmatprep.subr.mxu0 %v313
      %357 = vmatpush1.msra.mxu0 %v312
      %358 = vmatprep.subr.mxu0 %v315
      %359 = vmatpush1.msra.mxu0 %v314
      %360 = vmatprep.subr.mxu0 %v317
      %361 = vmatpush1.msra.mxu0 %v316
      %362 = vmatprep.subr.mxu0 %v319
      %363 = vmatpush1.msra.mxu0 %v318
      %364 = vmatprep.subr.mxu0 %v321
      %365 = vmatpush1.msra.mxu0 %v320
      %366 = vmatprep.subr.mxu0 %v323
      %367 = vmatpush1.msra.mxu0 %v322
      %368 = vmatprep.subr.mxu0 %v325
      %369 = vmatpush1.msra.mxu0 %v324
      %370 = vmatprep.subr.mxu0 %v327
      %371 = vmatpush1.msra.mxu0 %v326
      %372 = vmatprep.subr.mxu0 %v329
      %373 = vmatpush1.msra.mxu0 %v328
      %374 = vmatprep.subr.mxu0 0.0
      %375 = vmatpush1.msra.mxu0 0.0
      %376 = vmatprep.subr.mxu0 0.0
      %377 = vmatpush1.msra.mxu0 0.0
      %378 = vmatprep.subr.mxu0 0.0
      %379 = vmatpush1.msra.mxu0 0.0
      %380 = vmatprep.subr.mxu0 0.0
      %381 = vmatpush1.msra.mxu0 0.0
      %382 = vmatprep.subr.mxu0 0.0
      %383 = vmatpush1.msra.mxu0 0.0
      %384 = vmatprep.subr.mxu0 0.0
      %385 = vmatpush1.msra.mxu0 0.0
      %386 = vmatprep.subr.mxu0 0.0
      %387 = vmatpush1.msra.mxu0 0.0
      %388 = vmatprep.subr.mxu0 0.0
      %389 = vmatpush1.msra.mxu0 0.0
      %390 = vmatprep.subr.mxu0 0.0
      %391 = vmatpush1.msra.mxu0 0.0
      %392 = vmatprep.subr.mxu0 0.0
      %393 = vmatpush1.msra.mxu0 0.0
      %394 = vmatprep.subr.mxu0 0.0
      %395 = vmatpush1.msra.mxu0 0.0
      %396 = vmatprep.subr.mxu0 0.0
      %397 = vmatpush1.msra.mxu0 0.0
      %398 = vmatprep.subr.mxu0 0.0
      %399 = vmatpush1.msra.mxu0 0.0
      %400 = vmatprep.subr.mxu0 0.0
      %401 = vmatpush1.msra.mxu0 0.0
      %402 = vmatprep.subr.mxu0 0.0
      %403 = vmatpush1.msra.mxu0 0.0
      %404 = vmatprep.subr.mxu0 0.0
      %405 = vmatpush1.msra.mxu0 0.0
      %406 = vmatprep.mubr.f32.mxu0 0.0
      %407 = vmatmul.mubr.f32.gmra.mrb[0].mxu0 %v282
      %v408 = vpop.f32.mrb[0].mxu0
      %v409 = vadd.f32 %v335, %v408
      %v410 = vpop.f32.mrb[0].mxu0
      %v411 = vadd.f32 %v339, %v410
      %412 = vmatprep.mubr.f32.mxu0 0.0
      %413 = vmatmul.mubr.f32.gmra.mrb[0].mxu0 %v283
      %v414 = vpop.f32.mrb[0].mxu0
      %v415 = vadd.f32 %v335, %v414
      %v416 = vpop.f32.mrb[0].mxu0
      %v417 = vadd.f32 %v339, %v416
      %418 = vmatprep.mubr.f32.mxu0 0.0
      %419 = vmatmul.mubr.f32.gmra.mrb[0].mxu0 %v284
      %v420 = vpop.f32.mrb[0].mxu0
      %v421 = vadd.f32 %v335, %v420
      %v422 = vpop.f32.mrb[0].mxu0
      %v423 = vadd.f32 %v339, %v422
      %424 = vmatprep.mubr.f32.mxu0 0.0
      %425 = vmatmul.mubr.f32.gmra.mrb[0].mxu0 %v285
      %v426 = vpop.f32.mrb[0].mxu0
      %v427 = vadd.f32 %v335, %v426
      %v428 = vpop.f32.mrb[0].mxu0
      %v429 = vadd.f32 %v339, %v428
      %430 = vmatprep.mubr.f32.mxu0 0.0
      %431 = vmatmul.mubr.f32.gmra.mrb[0].mxu0 %v286
      %v432 = vpop.f32.mrb[0].mxu0
      %v433 = vadd.f32 %v335, %v432
      %v434 = vpop.f32.mrb[0].mxu0
      %v435 = vadd.f32 %v339, %v434
      %436 = vmatprep.mubr.f32.mxu0 0.0
      %437 = vmatmul.mubr.f32.gmra.mrb[0].mxu0 %v287
      %v438 = vpop.f32.mrb[0].mxu0
      %v439 = vadd.f32 %v335, %v438
      %v440 = vpop.f32.mrb[0].mxu0
      %v441 = vadd.f32 %v339, %v440
      %442 = vmatprep.mubr.f32.mxu0 0.0
      %443 = vmatmul.mubr.f32.gmra.mrb[0].mxu0 %v288
      %v444 = vpop.f32.mrb[0].mxu0
      %v445 = vadd.f32 %v335, %v444
      %v446 = vpop.f32.mrb[0].mxu0
      %v447 = vadd.f32 %v339, %v446
      %448 = vmatprep.mubr.f32.mxu0 0.0
      %449 = vmatmul.mubr.f32.gmra.mrb[0].mxu0 %v289
      %v450 = vpop.f32.mrb[0].mxu0
      %v451 = vadd.f32 %v335, %v450
      %v452 = vpop.f32.mrb[0].mxu0
      %v453 = vadd.f32 %v339, %v452
      %454 = vmatprep.mubr.f32.mxu0 0.0
      %455 = vmatmul.mubr.f32.gmra.mrb[0].mxu0 %v290
      %v456 = vpop.f32.mrb[0].mxu0
      %v457 = vadd.f32 %v335, %v456
      %v458 = vpop.f32.mrb[0].mxu0
      %v459 = vadd.f32 %v339, %v458
      %460 = vmatprep.mubr.f32.mxu0 0.0
      %461 = vmatmul.mubr.f32.gmra.mrb[0].mxu0 %v291
      %v462 = vpop.f32.mrb[0].mxu0
      %v463 = vadd.f32 %v335, %v462
      %v464 = vpop.f32.mrb[0].mxu0
      %v465 = vadd.f32 %v339, %v464
      %466 = vmatprep.mubr.f32.mxu0 0.0
      %467 = vmatmul.mubr.f32.gmra.mrb[0].mxu0 %v292
      %v468 = vpop.f32.mrb[0].mxu0
      %v469 = vadd.f32 %v335, %v468
      %v470 = vpop.f32.mrb[0].mxu0
      %v471 = vadd.f32 %v339, %v470
      %472 = vmatprep.mubr.f32.mxu0 0.0
      %473 = vmatmul.mubr.f32.gmra.mrb[0].mxu0 %v293
      %v474 = vpop.f32.mrb[0].mxu0
      %v475 = vadd.f32 %v335, %v474
      %v476 = vpop.f32.mrb[0].mxu0
      %v477 = vadd.f32 %v339, %v476
      %478 = vmatprep.mubr.f32.mxu0 0.0
      %479 = vmatmul.mubr.f32.gmra.mrb[0].mxu0 %v294
      %v480 = vpop.f32.mrb[0].mxu0
      %v481 = vadd.f32 %v335, %v480
      %v482 = vpop.f32.mrb[0].mxu0
      %v483 = vadd.f32 %v339, %v482
      %484 = vmatprep.mubr.f32.mxu0 0.0
      %485 = vmatmul.mubr.f32.gmra.mrb[0].mxu0 %v295
      %v486 = vpop.f32.mrb[0].mxu0
      %v487 = vadd.f32 %v335, %v486
      %v488 = vpop.f32.mrb[0].mxu0
      %v489 = vadd.f32 %v339, %v488
      %490 = vmatprep.mubr.f32.mxu0 0.0
      %491 = vmatmul.mubr.f32.gmra.mrb[0].mxu0 %v296
      %v492 = vpop.f32.mrb[0].mxu0
      %v493 = vadd.f32 %v335, %v492
      %v494 = vpop.f32.mrb[0].mxu0
      %v495 = vadd.f32 %v339, %v494
      %496 = vmatprep.mubr.f32.mxu0 0.0
      %497 = vmatmul.mubr.f32.gmra.mrb[0].mxu0 %v297
      %v498 = vpop.f32.mrb[0].mxu0
      %v499 = vadd.f32 %v335, %v498
      %v500 = vpop.f32.mrb[0].mxu0
      %v501 = vadd.f32 %v339, %v500
      %502 = vdwg.mxu0
      %vm503 = vcmp.gt.f32.partialorder %v409, 0.0
      %vm504 = vcmp.gt.f32.partialorder %v411, 0.0
      %vm505 = vcmp.gt.f32.partialorder %v415, 0.0
      %vm506 = vcmp.gt.f32.partialorder %v417, 0.0
      %vm507 = vcmp.gt.f32.partialorder %v421, 0.0
      %vm508 = vcmp.gt.f32.partialorder %v423, 0.0
      %vm509 = vcmp.gt.f32.partialorder %v427, 0.0
      %vm510 = vcmp.gt.f32.partialorder %v429, 0.0
      %vm511 = vcmp.gt.f32.partialorder %v433, 0.0
      %vm512 = vcmp.gt.f32.partialorder %v435, 0.0
      %vm513 = vcmp.gt.f32.partialorder %v439, 0.0
      %vm514 = vcmp.gt.f32.partialorder %v441, 0.0
      %vm515 = vcmp.gt.f32.partialorder %v445, 0.0
      %vm516 = vcmp.gt.f32.partialorder %v447, 0.0
      %vm517 = vcmp.gt.f32.partialorder %v451, 0.0
      %vm518 = vcmp.gt.f32.partialorder %v453, 0.0
      %vm519 = vcmp.gt.f32.partialorder %v457, 0.0
      %vm520 = vcmp.gt.f32.partialorder %v459, 0.0
      %vm521 = vcmp.gt.f32.partialorder %v463, 0.0
      %vm522 = vcmp.gt.f32.partialorder %v465, 0.0
      %vm523 = vcmp.gt.f32.partialorder %v469, 0.0
      %vm524 = vcmp.gt.f32.partialorder %v471, 0.0
      %vm525 = vcmp.gt.f32.partialorder %v475, 0.0
      %vm526 = vcmp.gt.f32.partialorder %v477, 0.0
      %vm527 = vcmp.gt.f32.partialorder %v481, 0.0
      %vm528 = vcmp.gt.f32.partialorder %v483, 0.0
      %vm529 = vcmp.gt.f32.partialorder %v487, 0.0
      %vm530 = vcmp.gt.f32.partialorder %v489, 0.0
      %vm531 = vcmp.gt.f32.partialorder %v493, 0.0
      %vm532 = vcmp.gt.f32.partialorder %v495, 0.0
      %vm533 = vcmp.gt.f32.partialorder %v499, 0.0
      %vm534 = vcmp.gt.f32.partialorder %v501, 0.0
      %v535 = vmul.f32 %v409, 1.442695
      %v536 = vpow.pop %v535
      %v537 = vmul.f32 %v411, 1.442695
      %v538 = vpow.pop %v537
      %v539 = vmul.f32 %v415, 1.442695
      %v540 = vpow.pop %v539
      %v541 = vmul.f32 %v417, 1.442695
      %v542 = vpow.pop %v541
      %v543 = vmul.f32 %v421, 1.442695
      %v544 = vpow.pop %v543
      %v545 = vmul.f32 %v423, 1.442695
      %v546 = vpow.pop %v545
      %v547 = vmul.f32 %v427, 1.442695
      %v548 = vpow.pop %v547
      %v549 = vmul.f32 %v429, 1.442695
      %v550 = vpow.pop %v549
      %v551 = vmul.f32 %v433, 1.442695
      %v552 = vpow.pop %v551
      %v553 = vmul.f32 %v435, 1.442695
      %v554 = vpow.pop %v553
      %v555 = vmul.f32 %v439, 1.442695
      %v556 = vpow.pop %v555
      %v557 = vmul.f32 %v441, 1.442695
      %v558 = vpow.pop %v557
      %v559 = vmul.f32 %v445, 1.442695
      %v560 = vpow.pop %v559
      %v561 = vmul.f32 %v447, 1.442695
      %v562 = vpow.pop %v561
      %v563 = vmul.f32 %v451, 1.442695
      %v564 = vpow.pop %v563
      %v565 = vmul.f32 %v453, 1.442695
      %v566 = vpow.pop %v565
      %v567 = vmul.f32 %v457, 1.442695
      %v568 = vpow.pop %v567
      %v569 = vmul.f32 %v459, 1.442695
      %v570 = vpow.pop %v569
      %v571 = vmul.f32 %v463, 1.442695
      %v572 = vpow.pop %v571
      %v573 = vmul.f32 %v465, 1.442695
      %v574 = vpow.pop %v573
      %v575 = vmul.f32 %v469, 1.442695
      %v576 = vpow.pop %v575
      %v577 = vmul.f32 %v471, 1.442695
      %v578 = vpow.pop %v577
      %v579 = vmul.f32 %v475, 1.442695
      %v580 = vpow.pop %v579
      %v581 = vmul.f32 %v477, 1.442695
      %v582 = vpow.pop %v581
      %v583 = vmul.f32 %v481, 1.442695
      %v584 = vpow.pop %v583
      %v585 = vmul.f32 %v483, 1.442695
      %v586 = vpow.pop %v585
      %v587 = vmul.f32 %v487, 1.442695
      %v588 = vpow.pop %v587
      %v589 = vmul.f32 %v489, 1.442695
      %v590 = vpow.pop %v589
      %v591 = vmul.f32 %v493, 1.442695
      %v592 = vpow.pop %v591
      %v593 = vmul.f32 %v495, 1.442695
      %v594 = vpow.pop %v593
      %v595 = vmul.f32 %v499, 1.442695
      %v596 = vpow.pop %v595
      %v597 = vmul.f32 %v501, 1.442695
      %v598 = vpow.pop %v597
      %v599 = vsub.f32 %v536, 1.0
      %v600 = vsub.f32 %v538, 1.0
      %v601 = vsub.f32 %v540, 1.0
      %v602 = vsub.f32 %v542, 1.0
      %v603 = vsub.f32 %v544, 1.0
      %v604 = vsub.f32 %v546, 1.0
      %v605 = vsub.f32 %v548, 1.0
      %v606 = vsub.f32 %v550, 1.0
      %v607 = vsub.f32 %v552, 1.0
      %v608 = vsub.f32 %v554, 1.0
      %v609 = vsub.f32 %v556, 1.0
      %v610 = vsub.f32 %v558, 1.0
      %v611 = vsub.f32 %v560, 1.0
      %v612 = vsub.f32 %v562, 1.0
      %v613 = vsub.f32 %v564, 1.0
      %v614 = vsub.f32 %v566, 1.0
      %v615 = vsub.f32 %v568, 1.0
      %v616 = vsub.f32 %v570, 1.0
      %v617 = vsub.f32 %v572, 1.0
      %v618 = vsub.f32 %v574, 1.0
      %v619 = vsub.f32 %v576, 1.0
      %v620 = vsub.f32 %v578, 1.0
      %v621 = vsub.f32 %v580, 1.0
      %v622 = vsub.f32 %v582, 1.0
      %v623 = vsub.f32 %v584, 1.0
      %v624 = vsub.f32 %v586, 1.0
      %v625 = vsub.f32 %v588, 1.0
      %v626 = vsub.f32 %v590, 1.0
      %v627 = vsub.f32 %v592, 1.0
      %v628 = vsub.f32 %v594, 1.0
      %v629 = vsub.f32 %v596, 1.0
      %v630 = vsub.f32 %v598, 1.0
      %v631 = vmul.f32 %v599, 1.6732632
      %v632 = vmul.f32 %v600, 1.6732632
      %v633 = vmul.f32 %v601, 1.6732632
      %v634 = vmul.f32 %v602, 1.6732632
      %v635 = vmul.f32 %v603, 1.6732632
      %v636 = vmul.f32 %v604, 1.6732632
      %v637 = vmul.f32 %v605, 1.6732632
      %v638 = vmul.f32 %v606, 1.6732632
      %v639 = vmul.f32 %v607, 1.6732632
      %v640 = vmul.f32 %v608, 1.6732632
      %v641 = vmul.f32 %v609, 1.6732632
      %v642 = vmul.f32 %v610, 1.6732632
      %v643 = vmul.f32 %v611, 1.6732632
      %v644 = vmul.f32 %v612, 1.6732632
      %v645 = vmul.f32 %v613, 1.6732632
      %v646 = vmul.f32 %v614, 1.6732632
      %v647 = vmul.f32 %v615, 1.6732632
      %v648 = vmul.f32 %v616, 1.6732632
      %v649 = vmul.f32 %v617, 1.6732632
      %v650 = vmul.f32 %v618, 1.6732632
      %v651 = vmul.f32 %v619, 1.6732632
      %v652 = vmul.f32 %v620, 1.6732632
      %v653 = vmul.f32 %v621, 1.6732632
      %v654 = vmul.f32 %v622, 1.6732632
      %v655 = vmul.f32 %v623, 1.6732632
      %v656 = vmul.f32 %v624, 1.6732632
      %v657 = vmul.f32 %v625, 1.6732632
      %v658 = vmul.f32 %v626, 1.6732632
      %v659 = vmul.f32 %v627, 1.6732632
      %v660 = vmul.f32 %v628, 1.6732632
      %v661 = vmul.f32 %v629, 1.6732632
      %v662 = vmul.f32 %v630, 1.6732632
      %v663 = vsel %vm503, %v409, %v631
      %v664 = vsel %vm504, %v411, %v632
      %v665 = vsel %vm505, %v415, %v633
      %v666 = vsel %vm506, %v417, %v634
      %v667 = vsel %vm507, %v421, %v635
      %v668 = vsel %vm508, %v423, %v636
      %v669 = vsel %vm509, %v427, %v637
      %v670 = vsel %vm510, %v429, %v638
      %v671 = vsel %vm511, %v433, %v639
      %v672 = vsel %vm512, %v435, %v640
      %v673 = vsel %vm513, %v439, %v641
      %v674 = vsel %vm514, %v441, %v642
      %v675 = vsel %vm515, %v445, %v643
      %v676 = vsel %vm516, %v447, %v644
      %v677 = vsel %vm517, %v451, %v645
      %v678 = vsel %vm518, %v453, %v646
      %v679 = vsel %vm519, %v457, %v647
      %v680 = vsel %vm520, %v459, %v648
      %v681 = vsel %vm521, %v463, %v649
      %v682 = vsel %vm522, %v465, %v650
      %v683 = vsel %vm523, %v469, %v651
      %v684 = vsel %vm524, %v471, %v652
      %v685 = vsel %vm525, %v475, %v653
      %v686 = vsel %vm526, %v477, %v654
      %v687 = vsel %vm527, %v481, %v655
      %v688 = vsel %vm528, %v483, %v656
      %v689 = vsel %vm529, %v487, %v657
      %v690 = vsel %vm530, %v489, %v658
      %v691 = vsel %vm531, %v493, %v659
      %v692 = vsel %vm532, %v495, %v660
      %v693 = vsel %vm533, %v499, %v661
      %v694 = vsel %vm534, %v501, %v662
      %v695 = vmul.f32 %v663, 1.050701
      %v696 = vmul.f32 %v664, 1.050701
      %v697 = vmul.f32 %v665, 1.050701
      %v698 = vmul.f32 %v666, 1.050701
      %v699 = vmul.f32 %v667, 1.050701
      %v700 = vmul.f32 %v668, 1.050701
      %v701 = vmul.f32 %v669, 1.050701
      %v702 = vmul.f32 %v670, 1.050701
      %v703 = vmul.f32 %v671, 1.050701
      %v704 = vmul.f32 %v672, 1.050701
      %v705 = vmul.f32 %v673, 1.050701
      %v706 = vmul.f32 %v674, 1.050701
      %v707 = vmul.f32 %v675, 1.050701
      %v708 = vmul.f32 %v676, 1.050701
      %v709 = vmul.f32 %v677, 1.050701
      %v710 = vmul.f32 %v678, 1.050701
      %v711 = vmul.f32 %v679, 1.050701
      %v712 = vmul.f32 %v680, 1.050701
      %v713 = vmul.f32 %v681, 1.050701
      %v714 = vmul.f32 %v682, 1.050701
      %v715 = vmul.f32 %v683, 1.050701
      %v716 = vmul.f32 %v684, 1.050701
      %v717 = vmul.f32 %v685, 1.050701
      %v718 = vmul.f32 %v686, 1.050701
      %v719 = vmul.f32 %v687, 1.050701
      %v720 = vmul.f32 %v688, 1.050701
      %v721 = vmul.f32 %v689, 1.050701
      %v722 = vmul.f32 %v690, 1.050701
      %v723 = vmul.f32 %v691, 1.050701
      %v724 = vmul.f32 %v692, 1.050701
      %v725 = vmul.f32 %v693, 1.050701
      %v726 = vmul.f32 %v694, 1.050701
      %v727 = vld [vmem:[%s3] sm:$0xff]
      %v728 = vld [vmem:[%s3 + $0x8] sm:$0xff]
      %v729 = vld [vmem:[%s3 + $0x10] sm:$0xff]
      %v730 = vld [vmem:[%s3 + $0x18] sm:$0xff]
      %v731 = vld [vmem:[%s3 + $0x20] sm:$0xff]
      %v732 = vld [vmem:[%s3 + $0x28] sm:$0xff]
      %v733 = vld [vmem:[%s3 + $0x30] sm:$0xff]
      %v734 = vld [vmem:[%s3 + $0x38] sm:$0xff]
      %v735 = vld [vmem:[%s3 + $0x40] sm:$0xff]
      %v736 = vld [vmem:[%s3 + $0x48] sm:$0xff]
      %v737 = vld [vmem:[%s3 + $0x50] sm:$0xff]
      %v738 = vld [vmem:[%s3 + $0x58] sm:$0xff]
      %v739 = vld [vmem:[%s3 + $0x60] sm:$0xff]
      %v740 = vld [vmem:[%s3 + $0x68] sm:$0xff]
      %v741 = vld [vmem:[%s3 + $0x70] sm:$0xff]
      %v742 = vld [vmem:[%s3 + $0x78] sm:$0xff]
      %v743 = vld [vmem:[%s3 + $0x80] sm:$0xff]
      %v744 = vld [vmem:[%s3 + $0x88] sm:$0xff]
      %v745 = vld [vmem:[%s3 + $0x90] sm:$0xff]
      %v746 = vld [vmem:[%s3 + $0x98] sm:$0xff]
      %v747 = vld [vmem:[%s3 + $0xa0] sm:$0xff]
      %v748 = vld [vmem:[%s3 + $0xa8] sm:$0xff]
      %v749 = vld [vmem:[%s3 + $0xb0] sm:$0xff]
      %v750 = vld [vmem:[%s3 + $0xb8] sm:$0xff]
      %v751 = vld [vmem:[%s3 + $0xc0] sm:$0xff]
      %v752 = vld [vmem:[%s3 + $0xc8] sm:$0xff]
      %v753 = vld [vmem:[%s3 + $0xd0] sm:$0xff]
      %v754 = vld [vmem:[%s3 + $0xd8] sm:$0xff]
      %v755 = vld [vmem:[%s3 + $0xe0] sm:$0xff]
      %v756 = vld [vmem:[%s3 + $0xe8] sm:$0xff]
      %v757 = vld [vmem:[%s3 + $0xf0] sm:$0xff]
      %v758 = vld [vmem:[%s3 + $0xf8] sm:$0xff]
      %v759 = vld [vmem:[%s3 + $0x100] sm:$0xff]
      %v760 = vld [vmem:[%s3 + $0x108] sm:$0xff]
      %v761 = vld [vmem:[%s3 + $0x110] sm:$0xff]
      %v762 = vld [vmem:[%s3 + $0x118] sm:$0xff]
      %v763 = vld [vmem:[%s3 + $0x120] sm:$0xff]
      %v764 = vld [vmem:[%s3 + $0x128] sm:$0xff]
      %v765 = vld [vmem:[%s3 + $0x130] sm:$0xff]
      %v766 = vld [vmem:[%s3 + $0x138] sm:$0xff]
      %v767 = vld [vmem:[%s3 + $0x140] sm:$0xff]
      %v768 = vld [vmem:[%s3 + $0x148] sm:$0xff]
      %v769 = vld [vmem:[%s3 + $0x150] sm:$0xff]
      %v770 = vld [vmem:[%s3 + $0x158] sm:$0xff]
      %v771 = vld [vmem:[%s3 + $0x160] sm:$0xff]
      %v772 = vld [vmem:[%s3 + $0x168] sm:$0xff]
      %v773 = vld [vmem:[%s3 + $0x170] sm:$0xff]
      %v774 = vld [vmem:[%s3 + $0x178] sm:$0xff]
      %v775 = vld [vmem:[%s3 + $0x180] sm:$0xff]
      %v776 = vld [vmem:[%s3 + $0x188] sm:$0xff]
      %v777 = vld [vmem:[%s4] sm:$0x3]
      %v779 = vlaneseq
      %v780 = vshrl.u32 %v779, 7
      %v781 = vsub.s32 0, %v780
      %v782 = vrot.slane %v777, %v781
      %v783 = vlaneseq
      %v784 = vshrl.u32 %v783, 7
      %v785 = vsub.s32 1, %v784
      %v786 = vrot.slane %v777, %v785
      %vm789 = vcmask 588800
      %v791 = vsel %vm789, %v696, 0
      %v794 = vsel %vm789, %v698, 0
      %v797 = vsel %vm789, %v700, 0
      %v800 = vsel %vm789, %v702, 0
      %v803 = vsel %vm789, %v704, 0
      %v806 = vsel %vm789, %v706, 0
      %v809 = vsel %vm789, %v708, 0
      %v812 = vsel %vm789, %v710, 0
      %v815 = vsel %vm789, %v712, 0
      %v818 = vsel %vm789, %v714, 0
      %v821 = vsel %vm789, %v716, 0
      %v824 = vsel %vm789, %v718, 0
      %v827 = vsel %vm789, %v720, 0
      %v830 = vsel %vm789, %v722, 0
      %v833 = vsel %vm789, %v724, 0
      %v836 = vsel %vm789, %v726, 0
      %838 = vmatprep.subr.mxu0 %v728
      %839 = vmatpush1.msra.mxu0 %v727
      %840 = vmatprep.subr.mxu0 %v730
      %841 = vmatpush1.msra.mxu0 %v729
      %842 = vmatprep.subr.mxu0 %v732
      %843 = vmatpush1.msra.mxu0 %v731
      %844 = vmatprep.subr.mxu0 %v734
      %845 = vmatpush1.msra.mxu0 %v733
      %846 = vmatprep.subr.mxu0 %v736
      %847 = vmatpush1.msra.mxu0 %v735
      %848 = vmatprep.subr.mxu0 %v738
      %849 = vmatpush1.msra.mxu0 %v737
      %850 = vmatprep.subr.mxu0 %v740
      %851 = vmatpush1.msra.mxu0 %v739
      %852 = vmatprep.subr.mxu0 %v742
      %853 = vmatpush1.msra.mxu0 %v741
      %854 = vmatprep.subr.mxu0 %v744
      %855 = vmatpush1.msra.mxu0 %v743
      %856 = vmatprep.subr.mxu0 %v746
      %857 = vmatpush1.msra.mxu0 %v745
      %858 = vmatprep.subr.mxu0 %v748
      %859 = vmatpush1.msra.mxu0 %v747
      %860 = vmatprep.subr.mxu0 %v750
      %861 = vmatpush1.msra.mxu0 %v749
      %862 = vmatprep.subr.mxu0 %v752
      %863 = vmatpush1.msra.mxu0 %v751
      %864 = vmatprep.subr.mxu0 %v754
      %865 = vmatpush1.msra.mxu0 %v753
      %866 = vmatprep.subr.mxu0 %v756
      %867 = vmatpush1.msra.mxu0 %v755
      %868 = vmatprep.subr.mxu0 %v758
      %869 = vmatpush1.msra.mxu0 %v757
      %870 = vmatprep.subr.mxu0 %v760
      %871 = vmatpush1.msra.mxu0 %v759
      %872 = vmatprep.subr.mxu0 %v762
      %873 = vmatpush1.msra.mxu0 %v761
      %874 = vmatprep.subr.mxu0 %v764
      %875 = vmatpush1.msra.mxu0 %v763
      %876 = vmatprep.subr.mxu0 %v766
      %877 = vmatpush1.msra.mxu0 %v765
      %878 = vmatprep.subr.mxu0 %v768
      %879 = vmatpush1.msra.mxu0 %v767
      %880 = vmatprep.subr.mxu0 %v770
      %881 = vmatpush1.msra.mxu0 %v769
      %882 = vmatprep.subr.mxu0 %v772
      %883 = vmatpush1.msra.mxu0 %v771
      %884 = vmatprep.subr.mxu0 %v774
      %885 = vmatpush1.msra.mxu0 %v773
      %886 = vmatprep.subr.mxu0 %v776
      %887 = vmatpush1.msra.mxu0 %v775
      %888 = vmatprep.subr.mxu0 0.0
      %889 = vmatpush1.msra.mxu0 0.0
      %890 = vmatprep.subr.mxu0 0.0
      %891 = vmatpush1.msra.mxu0 0.0
      %892 = vmatprep.subr.mxu0 0.0
      %893 = vmatpush1.msra.mxu0 0.0
      %894 = vmatprep.subr.mxu0 0.0
      %895 = vmatpush1.msra.mxu0 0.0
      %896 = vmatprep.subr.mxu0 0.0
      %897 = vmatpush1.msra.mxu0 0.0
      %898 = vmatprep.subr.mxu0 0.0
      %899 = vmatpush1.msra.mxu0 0.0
      %900 = vmatprep.subr.mxu0 0.0
      %901 = vmatpush1.msra.mxu0 0.0
      %902 = vmatprep.mubr.f32.mxu0 %v791
      %903 = vmatmul.mubr.f32.gmra.mrb[0].mxu0 %v695
      %v904 = vpop.f32.mrb[0].mxu0
      %v905 = vadd.f32 %v782, %v904
      %v906 = vpop.f32.mrb[0].mxu0
      %v907 = vadd.f32 %v786, %v906
      %908 = vmatprep.mubr.f32.mxu0 %v794
      %909 = vmatmul.mubr.f32.gmra.mrb[0].mxu0 %v697
      %v910 = vpop.f32.mrb[0].mxu0
      %v911 = vadd.f32 %v782, %v910
      %v912 = vpop.f32.mrb[0].mxu0
      %v913 = vadd.f32 %v786, %v912
      %914 = vmatprep.mubr.f32.mxu0 %v797
      %915 = vmatmul.mubr.f32.gmra.mrb[0].mxu0 %v699
      %v916 = vpop.f32.mrb[0].mxu0
      %v917 = vadd.f32 %v782, %v916
      %v918 = vpop.f32.mrb[0].mxu0
      %v919 = vadd.f32 %v786, %v918
      %920 = vmatprep.mubr.f32.mxu0 %v800
      %921 = vmatmul.mubr.f32.gmra.mrb[0].mxu0 %v701
      %v922 = vpop.f32.mrb[0].mxu0
      %v923 = vadd.f32 %v782, %v922
      %v924 = vpop.f32.mrb[0].mxu0
      %v925 = vadd.f32 %v786, %v924
      %926 = vmatprep.mubr.f32.mxu0 %v803
      %927 = vmatmul.mubr.f32.gmra.mrb[0].mxu0 %v703
      %v928 = vpop.f32.mrb[0].mxu0
      %v929 = vadd.f32 %v782, %v928
      %v930 = vpop.f32.mrb[0].mxu0
      %v931 = vadd.f32 %v786, %v930
      %932 = vmatprep.mubr.f32.mxu0 %v806
      %933 = vmatmul.mubr.f32.gmra.mrb[0].mxu0 %v705
      %v934 = vpop.f32.mrb[0].mxu0
      %v935 = vadd.f32 %v782, %v934
      %v936 = vpop.f32.mrb[0].mxu0
      %v937 = vadd.f32 %v786, %v936
      %938 = vmatprep.mubr.f32.mxu0 %v809
      %939 = vmatmul.mubr.f32.gmra.mrb[0].mxu0 %v707
      %v940 = vpop.f32.mrb[0].mxu0
      %v941 = vadd.f32 %v782, %v940
      %v942 = vpop.f32.mrb[0].mxu0
      %v943 = vadd.f32 %v786, %v942
      %944 = vmatprep.mubr.f32.mxu0 %v812
      %945 = vmatmul.mubr.f32.gmra.mrb[0].mxu0 %v709
      %v946 = vpop.f32.mrb[0].mxu0
      %v947 = vadd.f32 %v782, %v946
      %v948 = vpop.f32.mrb[0].mxu0
      %v949 = vadd.f32 %v786, %v948
      %950 = vmatprep.mubr.f32.mxu0 %v815
      %951 = vmatmul.mubr.f32.gmra.mrb[0].mxu0 %v711
      %v952 = vpop.f32.mrb[0].mxu0
      %v953 = vadd.f32 %v782, %v952
      %v954 = vpop.f32.mrb[0].mxu0
      %v955 = vadd.f32 %v786, %v954
      %956 = vmatprep.mubr.f32.mxu0 %v818
      %957 = vmatmul.mubr.f32.gmra.mrb[0].mxu0 %v713
      %v958 = vpop.f32.mrb[0].mxu0
      %v959 = vadd.f32 %v782, %v958
      %v960 = vpop.f32.mrb[0].mxu0
      %v961 = vadd.f32 %v786, %v960
      %962 = vmatprep.mubr.f32.mxu0 %v821
      %963 = vmatmul.mubr.f32.gmra.mrb[0].mxu0 %v715
      %v964 = vpop.f32.mrb[0].mxu0
      %v965 = vadd.f32 %v782, %v964
      %v966 = vpop.f32.mrb[0].mxu0
      %v967 = vadd.f32 %v786, %v966
      %968 = vmatprep.mubr.f32.mxu0 %v824
      %969 = vmatmul.mubr.f32.gmra.mrb[0].mxu0 %v717
      %v970 = vpop.f32.mrb[0].mxu0
      %v971 = vadd.f32 %v782, %v970
      %v972 = vpop.f32.mrb[0].mxu0
      %v973 = vadd.f32 %v786, %v972
      %974 = vmatprep.mubr.f32.mxu0 %v827
      %975 = vmatmul.mubr.f32.gmra.mrb[0].mxu0 %v719
      %v976 = vpop.f32.mrb[0].mxu0
      %v977 = vadd.f32 %v782, %v976
      %v978 = vpop.f32.mrb[0].mxu0
      %v979 = vadd.f32 %v786, %v978
      %980 = vmatprep.mubr.f32.mxu0 %v830
      %981 = vmatmul.mubr.f32.gmra.mrb[0].mxu0 %v721
      %v982 = vpop.f32.mrb[0].mxu0
      %v983 = vadd.f32 %v782, %v982
      %v984 = vpop.f32.mrb[0].mxu0
      %v985 = vadd.f32 %v786, %v984
      %986 = vmatprep.mubr.f32.mxu0 %v833
      %987 = vmatmul.mubr.f32.gmra.mrb[0].mxu0 %v723
      %v988 = vpop.f32.mrb[0].mxu0
      %v989 = vadd.f32 %v782, %v988
      %v990 = vpop.f32.mrb[0].mxu0
      %v991 = vadd.f32 %v786, %v990
      %992 = vmatprep.mubr.f32.mxu0 %v836
      %993 = vmatmul.mubr.f32.gmra.mrb[0].mxu0 %v725
      %v994 = vpop.f32.mrb[0].mxu0
      %v995 = vadd.f32 %v782, %v994
      %v996 = vpop.f32.mrb[0].mxu0
      %v997 = vadd.f32 %v786, %v996
      %998 = vdwg.mxu0
      %vm999 = vcmp.gt.f32.partialorder %v905, 0.0
      %vm1000 = vcmp.gt.f32.partialorder %v907, 0.0
      %vm1001 = vcmp.gt.f32.partialorder %v911, 0.0
      %vm1002 = vcmp.gt.f32.partialorder %v913, 0.0
      %vm1003 = vcmp.gt.f32.partialorder %v917, 0.0
      %vm1004 = vcmp.gt.f32.partialorder %v919, 0.0
      %vm1005 = vcmp.gt.f32.partialorder %v923, 0.0
      %vm1006 = vcmp.gt.f32.partialorder %v925, 0.0
      %vm1007 = vcmp.gt.f32.partialorder %v929, 0.0
      %vm1008 = vcmp.gt.f32.partialorder %v931, 0.0
      %vm1009 = vcmp.gt.f32.partialorder %v935, 0.0
      %vm1010 = vcmp.gt.f32.partialorder %v937, 0.0
      %vm1011 = vcmp.gt.f32.partialorder %v941, 0.0
      %vm1012 = vcmp.gt.f32.partialorder %v943, 0.0
      %vm1013 = vcmp.gt.f32.partialorder %v947, 0.0
      %vm1014 = vcmp.gt.f32.partialorder %v949, 0.0
      %vm1015 = vcmp.gt.f32.partialorder %v953, 0.0
      %vm1016 = vcmp.gt.f32.partialorder %v955, 0.0
      %vm1017 = vcmp.gt.f32.partialorder %v959, 0.0
      %vm1018 = vcmp.gt.f32.partialorder %v961, 0.0
      %vm1019 = vcmp.gt.f32.partialorder %v965, 0.0
      %vm1020 = vcmp.gt.f32.partialorder %v967, 0.0
      %vm1021 = vcmp.gt.f32.partialorder %v971, 0.0
      %vm1022 = vcmp.gt.f32.partialorder %v973, 0.0
      %vm1023 = vcmp.gt.f32.partialorder %v977, 0.0
      %vm1024 = vcmp.gt.f32.partialorder %v979, 0.0
      %vm1025 = vcmp.gt.f32.partialorder %v983, 0.0
      %vm1026 = vcmp.gt.f32.partialorder %v985, 0.0
      %vm1027 = vcmp.gt.f32.partialorder %v989, 0.0
      %vm1028 = vcmp.gt.f32.partialorder %v991, 0.0
      %vm1029 = vcmp.gt.f32.partialorder %v995, 0.0
      %vm1030 = vcmp.gt.f32.partialorder %v997, 0.0
      %v1031 = vmul.f32 %v905, 1.442695
      %v1032 = vpow.pop %v1031
      %v1033 = vmul.f32 %v907, 1.442695
      %v1034 = vpow.pop %v1033
      %v1035 = vmul.f32 %v911, 1.442695
      %v1036 = vpow.pop %v1035
      %v1037 = vmul.f32 %v913, 1.442695
      %v1038 = vpow.pop %v1037
      %v1039 = vmul.f32 %v917, 1.442695
      %v1040 = vpow.pop %v1039
      %v1041 = vmul.f32 %v919, 1.442695
      %v1042 = vpow.pop %v1041
      %v1043 = vmul.f32 %v923, 1.442695
      %v1044 = vpow.pop %v1043
      %v1045 = vmul.f32 %v925, 1.442695
      %v1046 = vpow.pop %v1045
      %v1047 = vmul.f32 %v929, 1.442695
      %v1048 = vpow.pop %v1047
      %v1049 = vmul.f32 %v931, 1.442695
      %v1050 = vpow.pop %v1049
      %v1051 = vmul.f32 %v935, 1.442695
      %v1052 = vpow.pop %v1051
      %v1053 = vmul.f32 %v937, 1.442695
      %v1054 = vpow.pop %v1053
      %v1055 = vmul.f32 %v941, 1.442695
      %v1056 = vpow.pop %v1055
      %v1057 = vmul.f32 %v943, 1.442695
      %v1058 = vpow.pop %v1057
      %v1059 = vmul.f32 %v947, 1.442695
      %v1060 = vpow.pop %v1059
      %v1061 = vmul.f32 %v949, 1.442695
      %v1062 = vpow.pop %v1061
      %v1063 = vmul.f32 %v953, 1.442695
      %v1064 = vpow.pop %v1063
      %v1065 = vmul.f32 %v955, 1.442695
      %v1066 = vpow.pop %v1065
      %v1067 = vmul.f32 %v959, 1.442695
      %v1068 = vpow.pop %v1067
      %v1069 = vmul.f32 %v961, 1.442695
      %v1070 = vpow.pop %v1069
      %v1071 = vmul.f32 %v965, 1.442695
      %v1072 = vpow.pop %v1071
      %v1073 = vmul.f32 %v967, 1.442695
      %v1074 = vpow.pop %v1073
      %v1075 = vmul.f32 %v971, 1.442695
      %v1076 = vpow.pop %v1075
      %v1077 = vmul.f32 %v973, 1.442695
      %v1078 = vpow.pop %v1077
      %v1079 = vmul.f32 %v977, 1.442695
      %v1080 = vpow.pop %v1079
      %v1081 = vmul.f32 %v979, 1.442695
      %v1082 = vpow.pop %v1081
      %v1083 = vmul.f32 %v983, 1.442695
      %v1084 = vpow.pop %v1083
      %v1085 = vmul.f32 %v985, 1.442695
      %v1086 = vpow.pop %v1085
      %v1087 = vmul.f32 %v989, 1.442695
      %v1088 = vpow.pop %v1087
      %v1089 = vmul.f32 %v991, 1.442695
      %v1090 = vpow.pop %v1089
      %v1091 = vmul.f32 %v995, 1.442695
      %v1092 = vpow.pop %v1091
      %v1093 = vmul.f32 %v997, 1.442695
      %v1094 = vpow.pop %v1093
      %v1095 = vsub.f32 %v1032, 1.0
      %v1096 = vsub.f32 %v1034, 1.0
      %v1097 = vsub.f32 %v1036, 1.0
      %v1098 = vsub.f32 %v1038, 1.0
      %v1099 = vsub.f32 %v1040, 1.0
      %v1100 = vsub.f32 %v1042, 1.0
      %v1101 = vsub.f32 %v1044, 1.0
      %v1102 = vsub.f32 %v1046, 1.0
      %v1103 = vsub.f32 %v1048, 1.0
      %v1104 = vsub.f32 %v1050, 1.0
      %v1105 = vsub.f32 %v1052, 1.0
      %v1106 = vsub.f32 %v1054, 1.0
      %v1107 = vsub.f32 %v1056, 1.0
      %v1108 = vsub.f32 %v1058, 1.0
      %v1109 = vsub.f32 %v1060, 1.0
      %v1110 = vsub.f32 %v1062, 1.0
      %v1111 = vsub.f32 %v1064, 1.0
      %v1112 = vsub.f32 %v1066, 1.0
      %v1113 = vsub.f32 %v1068, 1.0
      %v1114 = vsub.f32 %v1070, 1.0
      %v1115 = vsub.f32 %v1072, 1.0
      %v1116 = vsub.f32 %v1074, 1.0
      %v1117 = vsub.f32 %v1076, 1.0
      %v1118 = vsub.f32 %v1078, 1.0
      %v1119 = vsub.f32 %v1080, 1.0
      %v1120 = vsub.f32 %v1082, 1.0
      %v1121 = vsub.f32 %v1084, 1.0
      %v1122 = vsub.f32 %v1086, 1.0
      %v1123 = vsub.f32 %v1088, 1.0
      %v1124 = vsub.f32 %v1090, 1.0
      %v1125 = vsub.f32 %v1092, 1.0
      %v1126 = vsub.f32 %v1094, 1.0
      %v1127 = vmul.f32 %v1095, 1.6732632
      %v1128 = vmul.f32 %v1096, 1.6732632
      %v1129 = vmul.f32 %v1097, 1.6732632
      %v1130 = vmul.f32 %v1098, 1.6732632
      %v1131 = vmul.f32 %v1099, 1.6732632
      %v1132 = vmul.f32 %v1100, 1.6732632
      %v1133 = vmul.f32 %v1101, 1.6732632
      %v1134 = vmul.f32 %v1102, 1.6732632
      %v1135 = vmul.f32 %v1103, 1.6732632
      %v1136 = vmul.f32 %v1104, 1.6732632
      %v1137 = vmul.f32 %v1105, 1.6732632
      %v1138 = vmul.f32 %v1106, 1.6732632
      %v1139 = vmul.f32 %v1107, 1.6732632
      %v1140 = vmul.f32 %v1108, 1.6732632
      %v1141 = vmul.f32 %v1109, 1.6732632
      %v1142 = vmul.f32 %v1110, 1.6732632
      %v1143 = vmul.f32 %v1111, 1.6732632
      %v1144 = vmul.f32 %v1112, 1.6732632
      %v1145 = vmul.f32 %v1113, 1.6732632
      %v1146 = vmul.f32 %v1114, 1.6732632
      %v1147 = vmul.f32 %v1115, 1.6732632
      %v1148 = vmul.f32 %v1116, 1.6732632
      %v1149 = vmul.f32 %v1117, 1.6732632
      %v1150 = vmul.f32 %v1118, 1.6732632
      %v1151 = vmul.f32 %v1119, 1.6732632
      %v1152 = vmul.f32 %v1120, 1.6732632
      %v1153 = vmul.f32 %v1121, 1.6732632
      %v1154 = vmul.f32 %v1122, 1.6732632
      %v1155 = vmul.f32 %v1123, 1.6732632
      %v1156 = vmul.f32 %v1124, 1.6732632
      %v1157 = vmul.f32 %v1125, 1.6732632
      %v1158 = vmul.f32 %v1126, 1.6732632
      %v1159 = vsel %vm999, %v905, %v1127
      %v1160 = vsel %vm1000, %v907, %v1128
      %v1161 = vsel %vm1001, %v911, %v1129
      %v1162 = vsel %vm1002, %v913, %v1130
      %v1163 = vsel %vm1003, %v917, %v1131
      %v1164 = vsel %vm1004, %v919, %v1132
      %v1165 = vsel %vm1005, %v923, %v1133
      %v1166 = vsel %vm1006, %v925, %v1134
      %v1167 = vsel %vm1007, %v929, %v1135
      %v1168 = vsel %vm1008, %v931, %v1136
      %v1169 = vsel %vm1009, %v935, %v1137
      %v1170 = vsel %vm1010, %v937, %v1138
      %v1171 = vsel %vm1011, %v941, %v1139
      %v1172 = vsel %vm1012, %v943, %v1140
      %v1173 = vsel %vm1013, %v947, %v1141
      %v1174 = vsel %vm1014, %v949, %v1142
      %v1175 = vsel %vm1015, %v953, %v1143
      %v1176 = vsel %vm1016, %v955, %v1144
      %v1177 = vsel %vm1017, %v959, %v1145
      %v1178 = vsel %vm1018, %v961, %v1146
      %v1179 = vsel %vm1019, %v965, %v1147
      %v1180 = vsel %vm1020, %v967, %v1148
      %v1181 = vsel %vm1021, %v971, %v1149
      %v1182 = vsel %vm1022, %v973, %v1150
      %v1183 = vsel %vm1023, %v977, %v1151
      %v1184 = vsel %vm1024, %v979, %v1152
      %v1185 = vsel %vm1025, %v983, %v1153
      %v1186 = vsel %vm1026, %v985, %v1154
      %v1187 = vsel %vm1027, %v989, %v1155
      %v1188 = vsel %vm1028, %v991, %v1156
      %v1189 = vsel %vm1029, %v995, %v1157
      %v1190 = vsel %vm1030, %v997, %v1158
      %v1191 = vmul.f32 %v1159, 1.050701
      %v1192 = vmul.f32 %v1160, 1.050701
      %v1193 = vmul.f32 %v1161, 1.050701
      %v1194 = vmul.f32 %v1162, 1.050701
      %v1195 = vmul.f32 %v1163, 1.050701
      %v1196 = vmul.f32 %v1164, 1.050701
      %v1197 = vmul.f32 %v1165, 1.050701
      %v1198 = vmul.f32 %v1166, 1.050701
      %v1199 = vmul.f32 %v1167, 1.050701
      %v1200 = vmul.f32 %v1168, 1.050701
      %v1201 = vmul.f32 %v1169, 1.050701
      %v1202 = vmul.f32 %v1170, 1.050701
      %v1203 = vmul.f32 %v1171, 1.050701
      %v1204 = vmul.f32 %v1172, 1.050701
      %v1205 = vmul.f32 %v1173, 1.050701
      %v1206 = vmul.f32 %v1174, 1.050701
      %v1207 = vmul.f32 %v1175, 1.050701
      %v1208 = vmul.f32 %v1176, 1.050701
      %v1209 = vmul.f32 %v1177, 1.050701
      %v1210 = vmul.f32 %v1178, 1.050701
      %v1211 = vmul.f32 %v1179, 1.050701
      %v1212 = vmul.f32 %v1180, 1.050701
      %v1213 = vmul.f32 %v1181, 1.050701
      %v1214 = vmul.f32 %v1182, 1.050701
      %v1215 = vmul.f32 %v1183, 1.050701
      %v1216 = vmul.f32 %v1184, 1.050701
      %v1217 = vmul.f32 %v1185, 1.050701
      %v1218 = vmul.f32 %v1186, 1.050701
      %v1219 = vmul.f32 %v1187, 1.050701
      %v1220 = vmul.f32 %v1188, 1.050701
      %v1221 = vmul.f32 %v1189, 1.050701
      %v1222 = vmul.f32 %v1190, 1.050701
      %v1223 = vld [vmem:[%s5] sm:$0xff]
      %v1224 = vld [vmem:[%s5 + $0x8] sm:$0xff]
      %v1225 = vld [vmem:[%s5 + $0x10] sm:$0xff]
      %v1226 = vld [vmem:[%s5 + $0x18] sm:$0xff]
      %v1227 = vld [vmem:[%s5 + $0x20] sm:$0xff]
      %v1228 = vld [vmem:[%s5 + $0x28] sm:$0xff]
      %v1229 = vld [vmem:[%s5 + $0x30] sm:$0xff]
      %v1230 = vld [vmem:[%s5 + $0x38] sm:$0xff]
      %v1231 = vld [vmem:[%s5 + $0x40] sm:$0xff]
      %v1232 = vld [vmem:[%s5 + $0x48] sm:$0xff]
      %v1233 = vld [vmem:[%s5 + $0x50] sm:$0xff]
      %v1234 = vld [vmem:[%s5 + $0x58] sm:$0xff]
      %v1235 = vld [vmem:[%s5 + $0x60] sm:$0xff]
      %v1236 = vld [vmem:[%s5 + $0x68] sm:$0xff]
      %v1237 = vld [vmem:[%s5 + $0x70] sm:$0xff]
      %v1238 = vld [vmem:[%s5 + $0x78] sm:$0xff]
      %v1239 = vld [vmem:[%s5 + $0x80] sm:$0xff]
      %v1240 = vld [vmem:[%s5 + $0x88] sm:$0xff]
      %v1241 = vld [vmem:[%s5 + $0x90] sm:$0xff]
      %v1242 = vld [vmem:[%s5 + $0x98] sm:$0xff]
      %v1243 = vld [vmem:[%s5 + $0xa0] sm:$0xff]
      %v1244 = vld [vmem:[%s5 + $0xa8] sm:$0xff]
      %v1245 = vld [vmem:[%s5 + $0xb0] sm:$0xff]
      %v1246 = vld [vmem:[%s5 + $0xb8] sm:$0xff]
      %v1247 = vld [vmem:[%s5 + $0xc0] sm:$0xff]
      %v1248 = vld [vmem:[%s6] sm:$0x1]
      %v1250 = vlaneseq
      %v1251 = vshrl.u32 %v1250, 7
      %v1252 = vsub.s32 0, %v1251
      %v1253 = vrot.slane %v1248, %v1252
      %v1256 = vsel %vm789, %v1192, 0
      %v1259 = vsel %vm789, %v1194, 0
      %v1262 = vsel %vm789, %v1196, 0
      %v1265 = vsel %vm789, %v1198, 0
      %v1268 = vsel %vm789, %v1200, 0
      %v1271 = vsel %vm789, %v1202, 0
      %v1274 = vsel %vm789, %v1204, 0
      %v1277 = vsel %vm789, %v1206, 0
      %v1280 = vsel %vm789, %v1208, 0
      %v1283 = vsel %vm789, %v1210, 0
      %v1286 = vsel %vm789, %v1212, 0
      %v1289 = vsel %vm789, %v1214, 0
      %v1292 = vsel %vm789, %v1216, 0
      %v1295 = vsel %vm789, %v1218, 0
      %v1298 = vsel %vm789, %v1220, 0
      %v1301 = vsel %vm789, %v1222, 0
      %1303 = vmatprep.subr.mxu0 0.0
      %1304 = vmatpush1.msra.mxu0 %v1223
      %1305 = vmatprep.subr.mxu0 0.0
      %1306 = vmatpush1.msra.mxu0 %v1224
      %1307 = vmatprep.subr.mxu0 0.0
      %1308 = vmatpush1.msra.mxu0 %v1225
      %1309 = vmatprep.subr.mxu0 0.0
      %1310 = vmatpush1.msra.mxu0 %v1226
      %1311 = vmatprep.subr.mxu0 0.0
      %1312 = vmatpush1.msra.mxu0 %v1227
      %1313 = vmatprep.subr.mxu0 0.0
      %1314 = vmatpush1.msra.mxu0 %v1228
      %1315 = vmatprep.subr.mxu0 0.0
      %1316 = vmatpush1.msra.mxu0 %v1229
      %1317 = vmatprep.subr.mxu0 0.0
      %1318 = vmatpush1.msra.mxu0 %v1230
      %1319 = vmatprep.subr.mxu0 0.0
      %1320 = vmatpush1.msra.mxu0 %v1231
      %1321 = vmatprep.subr.mxu0 0.0
      %1322 = vmatpush1.msra.mxu0 %v1232
      %1323 = vmatprep.subr.mxu0 0.0
      %1324 = vmatpush1.msra.mxu0 %v1233
      %1325 = vmatprep.subr.mxu0 0.0
      %1326 = vmatpush1.msra.mxu0 %v1234
      %1327 = vmatprep.subr.mxu0 0.0
      %1328 = vmatpush1.msra.mxu0 %v1235
      %1329 = vmatprep.subr.mxu0 0.0
      %1330 = vmatpush1.msra.mxu0 %v1236
      %1331 = vmatprep.subr.mxu0 0.0
      %1332 = vmatpush1.msra.mxu0 %v1237
      %1333 = vmatprep.subr.mxu0 0.0
      %1334 = vmatpush1.msra.mxu0 %v1238
      %1335 = vmatprep.subr.mxu0 0.0
      %1336 = vmatpush1.msra.mxu0 %v1239
      %1337 = vmatprep.subr.mxu0 0.0
      %1338 = vmatpush1.msra.mxu0 %v1240
      %1339 = vmatprep.subr.mxu0 0.0
      %1340 = vmatpush1.msra.mxu0 %v1241
      %1341 = vmatprep.subr.mxu0 0.0
      %1342 = vmatpush1.msra.mxu0 %v1242
      %1343 = vmatprep.subr.mxu0 0.0
      %1344 = vmatpush1.msra.mxu0 %v1243
      %1345 = vmatprep.subr.mxu0 0.0
      %1346 = vmatpush1.msra.mxu0 %v1244
      %1347 = vmatprep.subr.mxu0 0.0
      %1348 = vmatpush1.msra.mxu0 %v1245
      %1349 = vmatprep.subr.mxu0 0.0
      %1350 = vmatpush1.msra.mxu0 %v1246
      %1351 = vmatprep.subr.mxu0 0.0
      %1352 = vmatpush1.msra.mxu0 %v1247
      %1353 = vmatprep.subr.mxu0 0.0
      %1354 = vmatpush1.msra.mxu0 0.0
      %1355 = vmatprep.subr.mxu0 0.0
      %1356 = vmatpush1.msra.mxu0 0.0
      %1357 = vmatprep.subr.mxu0 0.0
      %1358 = vmatpush1.msra.mxu0 0.0
      %1359 = vmatprep.subr.mxu0 0.0
      %1360 = vmatpush1.msra.mxu0 0.0
      %1361 = vmatprep.subr.mxu0 0.0
      %1362 = vmatpush1.msra.mxu0 0.0
      %1363 = vmatprep.subr.mxu0 0.0
      %1364 = vmatpush1.msra.mxu0 0.0
      %1365 = vmatprep.subr.mxu0 0.0
      %1366 = vmatpush1.msra.mxu0 0.0
      %1367 = vmatprep.mubr.f32.mxu0 %v1256
      %1368 = vmatmul.mubr.f32.gmra.mrb[0].mxu0 %v1191
      %v1369 = vpop.f32.mrb[0].mxu0
      %v1370 = vadd.f32 %v1253, %v1369
      %v1371 = vpop.f32.mrb[0].mxu0
      %1372 = vmatprep.mubr.f32.mxu0 %v1259
      %1373 = vmatmul.mubr.f32.gmra.mrb[0].mxu0 %v1193
      %v1374 = vpop.f32.mrb[0].mxu0
      %v1375 = vadd.f32 %v1253, %v1374
      %v1376 = vpop.f32.mrb[0].mxu0
      %1377 = vmatprep.mubr.f32.mxu0 %v1262
      %1378 = vmatmul.mubr.f32.gmra.mrb[0].mxu0 %v1195
      %v1379 = vpop.f32.mrb[0].mxu0
      %v1380 = vadd.f32 %v1253, %v1379
      %v1381 = vpop.f32.mrb[0].mxu0
      %1382 = vmatprep.mubr.f32.mxu0 %v1265
      %1383 = vmatmul.mubr.f32.gmra.mrb[0].mxu0 %v1197
      %v1384 = vpop.f32.mrb[0].mxu0
      %v1385 = vadd.f32 %v1253, %v1384
      %v1386 = vpop.f32.mrb[0].mxu0
      %1387 = vmatprep.mubr.f32.mxu0 %v1268
      %1388 = vmatmul.mubr.f32.gmra.mrb[0].mxu0 %v1199
      %v1389 = vpop.f32.mrb[0].mxu0
      %v1390 = vadd.f32 %v1253, %v1389
      %v1391 = vpop.f32.mrb[0].mxu0
      %1392 = vmatprep.mubr.f32.mxu0 %v1271
      %1393 = vmatmul.mubr.f32.gmra.mrb[0].mxu0 %v1201
      %v1394 = vpop.f32.mrb[0].mxu0
      %v1395 = vadd.f32 %v1253, %v1394
      %v1396 = vpop.f32.mrb[0].mxu0
      %1397 = vmatprep.mubr.f32.mxu0 %v1274
      %1398 = vmatmul.mubr.f32.gmra.mrb[0].mxu0 %v1203
      %v1399 = vpop.f32.mrb[0].mxu0
      %v1400 = vadd.f32 %v1253, %v1399
      %v1401 = vpop.f32.mrb[0].mxu0
      %1402 = vmatprep.mubr.f32.mxu0 %v1277
      %1403 = vmatmul.mubr.f32.gmra.mrb[0].mxu0 %v1205
      %v1404 = vpop.f32.mrb[0].mxu0
      %v1405 = vadd.f32 %v1253, %v1404
      %v1406 = vpop.f32.mrb[0].mxu0
      %1407 = vmatprep.mubr.f32.mxu0 %v1280
      %1408 = vmatmul.mubr.f32.gmra.mrb[0].mxu0 %v1207
      %v1409 = vpop.f32.mrb[0].mxu0
      %v1410 = vadd.f32 %v1253, %v1409
      %v1411 = vpop.f32.mrb[0].mxu0
      %1412 = vmatprep.mubr.f32.mxu0 %v1283
      %1413 = vmatmul.mubr.f32.gmra.mrb[0].mxu0 %v1209
      %v1414 = vpop.f32.mrb[0].mxu0
      %v1415 = vadd.f32 %v1253, %v1414
      %v1416 = vpop.f32.mrb[0].mxu0
      %1417 = vmatprep.mubr.f32.mxu0 %v1286
      %1418 = vmatmul.mubr.f32.gmra.mrb[0].mxu0 %v1211
      %v1419 = vpop.f32.mrb[0].mxu0
      %v1420 = vadd.f32 %v1253, %v1419
      %v1421 = vpop.f32.mrb[0].mxu0
      %1422 = vmatprep.mubr.f32.mxu0 %v1289
      %1423 = vmatmul.mubr.f32.gmra.mrb[0].mxu0 %v1213
      %v1424 = vpop.f32.mrb[0].mxu0
      %v1425 = vadd.f32 %v1253, %v1424
      %v1426 = vpop.f32.mrb[0].mxu0
      %1427 = vmatprep.mubr.f32.mxu0 %v1292
      %1428 = vmatmul.mubr.f32.gmra.mrb[0].mxu0 %v1215
      %v1429 = vpop.f32.mrb[0].mxu0
      %v1430 = vadd.f32 %v1253, %v1429
      %v1431 = vpop.f32.mrb[0].mxu0
      %1432 = vmatprep.mubr.f32.mxu0 %v1295
      %1433 = vmatmul.mubr.f32.gmra.mrb[0].mxu0 %v1217
      %v1434 = vpop.f32.mrb[0].mxu0
      %v1435 = vadd.f32 %v1253, %v1434
      %v1436 = vpop.f32.mrb[0].mxu0
      %1437 = vmatprep.mubr.f32.mxu0 %v1298
      %1438 = vmatmul.mubr.f32.gmra.mrb[0].mxu0 %v1219
      %v1439 = vpop.f32.mrb[0].mxu0
      %v1440 = vadd.f32 %v1253, %v1439
      %v1441 = vpop.f32.mrb[0].mxu0
      %1442 = vmatprep.mubr.f32.mxu0 %v1301
      %1443 = vmatmul.mubr.f32.gmra.mrb[0].mxu0 %v1221
      %v1444 = vpop.f32.mrb[0].mxu0
      %v1445 = vadd.f32 %v1253, %v1444
      %v1446 = vpop.f32.mrb[0].mxu0
      %1447 = vdwg.mxu0
      %1448 = vmax.xlane.f32.xlu0 %v1370
      %v1449 = vpop.xlane.xlu0 %1448
      %1450 = vmax.xlane.f32.xlu0 %v1375
      %v1451 = vpop.xlane.xlu0 %1450
      %1452 = vmax.xlane.f32.xlu0 %v1380
      %v1453 = vpop.xlane.xlu0 %1452
      %1454 = vmax.xlane.f32.xlu0 %v1385
      %v1455 = vpop.xlane.xlu0 %1454
      %1456 = vmax.xlane.f32.xlu0 %v1390
      %v1457 = vpop.xlane.xlu0 %1456
      %1458 = vmax.xlane.f32.xlu0 %v1395
      %v1459 = vpop.xlane.xlu0 %1458
      %1460 = vmax.xlane.f32.xlu0 %v1400
      %v1461 = vpop.xlane.xlu0 %1460
      %1462 = vmax.xlane.f32.xlu0 %v1405
      %v1463 = vpop.xlane.xlu0 %1462
      %1464 = vmax.xlane.f32.xlu0 %v1410
      %v1465 = vpop.xlane.xlu0 %1464
      %1466 = vmax.xlane.f32.xlu0 %v1415
      %v1467 = vpop.xlane.xlu0 %1466
      %1468 = vmax.xlane.f32.xlu0 %v1420
      %v1469 = vpop.xlane.xlu0 %1468
      %1470 = vmax.xlane.f32.xlu0 %v1425
      %v1471 = vpop.xlane.xlu0 %1470
      %1472 = vmax.xlane.f32.xlu0 %v1430
      %v1473 = vpop.xlane.xlu0 %1472
      %1474 = vmax.xlane.f32.xlu0 %v1435
      %v1475 = vpop.xlane.xlu0 %1474
      %1476 = vmax.xlane.f32.xlu0 %v1440
      %v1477 = vpop.xlane.xlu0 %1476
      %1478 = vmax.xlane.f32.xlu0 %v1445
      %v1479 = vpop.xlane.xlu0 %1478
      %v1480 = vsub.f32 %v1370, %v1449
      %v1481 = vsub.f32 %v1375, %v1451
      %v1482 = vsub.f32 %v1380, %v1453
      %v1483 = vsub.f32 %v1385, %v1455
      %v1484 = vsub.f32 %v1390, %v1457
      %v1485 = vsub.f32 %v1395, %v1459
      %v1486 = vsub.f32 %v1400, %v1461
      %v1487 = vsub.f32 %v1405, %v1463
      %v1488 = vsub.f32 %v1410, %v1465
      %v1489 = vsub.f32 %v1415, %v1467
      %v1490 = vsub.f32 %v1420, %v1469
      %v1491 = vsub.f32 %v1425, %v1471
      %v1492 = vsub.f32 %v1430, %v1473
      %v1493 = vsub.f32 %v1435, %v1475
      %v1494 = vsub.f32 %v1440, %v1477
      %v1495 = vsub.f32 %v1445, %v1479
      %v1496 = vmul.f32 %v1480, 1.442695
      %v1497 = vpow.pop %v1496
      %v1498 = vmul.f32 %v1481, 1.442695
      %v1499 = vpow.pop %v1498
      %v1500 = vmul.f32 %v1482, 1.442695
      %v1501 = vpow.pop %v1500
      %v1502 = vmul.f32 %v1483, 1.442695
      %v1503 = vpow.pop %v1502
      %v1504 = vmul.f32 %v1484, 1.442695
      %v1505 = vpow.pop %v1504
      %v1506 = vmul.f32 %v1485, 1.442695
      %v1507 = vpow.pop %v1506
      %v1508 = vmul.f32 %v1486, 1.442695
      %v1509 = vpow.pop %v1508
      %v1510 = vmul.f32 %v1487, 1.442695
      %v1511 = vpow.pop %v1510
      %v1512 = vmul.f32 %v1488, 1.442695
      %v1513 = vpow.pop %v1512
      %v1514 = vmul.f32 %v1489, 1.442695
      %v1515 = vpow.pop %v1514
      %v1516 = vmul.f32 %v1490, 1.442695
      %v1517 = vpow.pop %v1516
      %v1518 = vmul.f32 %v1491, 1.442695
      %v1519 = vpow.pop %v1518
      %v1520 = vmul.f32 %v1492, 1.442695
      %v1521 = vpow.pop %v1520
      %v1522 = vmul.f32 %v1493, 1.442695
      %v1523 = vpow.pop %v1522
      %v1524 = vmul.f32 %v1494, 1.442695
      %v1525 = vpow.pop %v1524
      %v1526 = vmul.f32 %v1495, 1.442695
      %v1527 = vpow.pop %v1526
      %1528 = vadd.xlane.f32.xlu0 %v1497
      %v1529 = vpop.xlane.xlu0 %1528
      %1530 = vadd.xlane.f32.xlu0 %v1499
      %v1531 = vpop.xlane.xlu0 %1530
      %1532 = vadd.xlane.f32.xlu0 %v1501
      %v1533 = vpop.xlane.xlu0 %1532
      %1534 = vadd.xlane.f32.xlu0 %v1503
      %v1535 = vpop.xlane.xlu0 %1534
      %1536 = vadd.xlane.f32.xlu0 %v1505
      %v1537 = vpop.xlane.xlu0 %1536
      %1538 = vadd.xlane.f32.xlu0 %v1507
      %v1539 = vpop.xlane.xlu0 %1538
      %1540 = vadd.xlane.f32.xlu0 %v1509
      %v1541 = vpop.xlane.xlu0 %1540
      %1542 = vadd.xlane.f32.xlu0 %v1511
      %v1543 = vpop.xlane.xlu0 %1542
      %1544 = vadd.xlane.f32.xlu0 %v1513
      %v1545 = vpop.xlane.xlu0 %1544
      %1546 = vadd.xlane.f32.xlu0 %v1515
      %v1547 = vpop.xlane.xlu0 %1546
      %1548 = vadd.xlane.f32.xlu0 %v1517
      %v1549 = vpop.xlane.xlu0 %1548
      %1550 = vadd.xlane.f32.xlu0 %v1519
      %v1551 = vpop.xlane.xlu0 %1550
      %1552 = vadd.xlane.f32.xlu0 %v1521
      %v1553 = vpop.xlane.xlu0 %1552
      %1554 = vadd.xlane.f32.xlu0 %v1523
      %v1555 = vpop.xlane.xlu0 %1554
      %1556 = vadd.xlane.f32.xlu0 %v1525
      %v1557 = vpop.xlane.xlu0 %1556
      %1558 = vadd.xlane.f32.xlu0 %v1527
      %v1559 = vpop.xlane.xlu0 %1558
      %v1560 = vlaneseq
      %v1561 = vand.u32 %v1560, 127
      %vm1562 = vcmp.eq.s32.totalorder %v1561, 2
      %v1563 = vsel %vm1562, %v1497, 0.0
      %v1564 = vsel %vm1562, %v1499, 0.0
      %v1565 = vsel %vm1562, %v1501, 0.0
      %v1566 = vsel %vm1562, %v1503, 0.0
      %v1567 = vsel %vm1562, %v1505, 0.0
      %v1568 = vsel %vm1562, %v1507, 0.0
      %v1569 = vsel %vm1562, %v1509, 0.0
      %v1570 = vsel %vm1562, %v1511, 0.0
      %v1571 = vsel %vm1562, %v1513, 0.0
      %v1572 = vsel %vm1562, %v1515, 0.0
      %v1573 = vsel %vm1562, %v1517, 0.0
      %v1574 = vsel %vm1562, %v1519, 0.0
      %v1575 = vsel %vm1562, %v1521, 0.0
      %v1576 = vsel %vm1562, %v1523, 0.0
      %v1577 = vsel %vm1562, %v1525, 0.0
      %v1578 = vsel %vm1562, %v1527, 0.0
      %1579 = vadd.xlane.f32.xlu0 %v1563
      %v1580 = vpop.xlane.xlu0 %1579
      %1581 = vadd.xlane.f32.xlu0 %v1564
      %v1582 = vpop.xlane.xlu0 %1581
      %1583 = vadd.xlane.f32.xlu0 %v1565
      %v1584 = vpop.xlane.xlu0 %1583
      %1585 = vadd.xlane.f32.xlu0 %v1566
      %v1586 = vpop.xlane.xlu0 %1585
      %1587 = vadd.xlane.f32.xlu0 %v1567
      %v1588 = vpop.xlane.xlu0 %1587
      %1589 = vadd.xlane.f32.xlu0 %v1568
      %v1590 = vpop.xlane.xlu0 %1589
      %1591 = vadd.xlane.f32.xlu0 %v1569
      %v1592 = vpop.xlane.xlu0 %1591
      %1593 = vadd.xlane.f32.xlu0 %v1570
      %v1594 = vpop.xlane.xlu0 %1593
      %1595 = vadd.xlane.f32.xlu0 %v1571
      %v1596 = vpop.xlane.xlu0 %1595
      %1597 = vadd.xlane.f32.xlu0 %v1572
      %v1598 = vpop.xlane.xlu0 %1597
      %1599 = vadd.xlane.f32.xlu0 %v1573
      %v1600 = vpop.xlane.xlu0 %1599
      %1601 = vadd.xlane.f32.xlu0 %v1574
      %v1602 = vpop.xlane.xlu0 %1601
      %1603 = vadd.xlane.f32.xlu0 %v1575
      %v1604 = vpop.xlane.xlu0 %1603
      %1605 = vadd.xlane.f32.xlu0 %v1576
      %v1606 = vpop.xlane.xlu0 %1605
      %1607 = vadd.xlane.f32.xlu0 %v1577
      %v1608 = vpop.xlane.xlu0 %1607
      %1609 = vadd.xlane.f32.xlu0 %v1578
      %v1610 = vpop.xlane.xlu0 %1609
      %v1611 = vrcp.pop %v1529
      %v1612 = vmul.f32 %v1580, %v1611
      %v1613 = vrcp.pop %v1531
      %v1614 = vmul.f32 %v1582, %v1613
      %v1615 = vrcp.pop %v1533
      %v1616 = vmul.f32 %v1584, %v1615
      %v1617 = vrcp.pop %v1535
      %v1618 = vmul.f32 %v1586, %v1617
      %v1619 = vrcp.pop %v1537
      %v1620 = vmul.f32 %v1588, %v1619
      %v1621 = vrcp.pop %v1539
      %v1622 = vmul.f32 %v1590, %v1621
      %v1623 = vrcp.pop %v1541
      %v1624 = vmul.f32 %v1592, %v1623
      %v1625 = vrcp.pop %v1543
      %v1626 = vmul.f32 %v1594, %v1625
      %v1627 = vrcp.pop %v1545
      %v1628 = vmul.f32 %v1596, %v1627
      %v1629 = vrcp.pop %v1547
      %v1630 = vmul.f32 %v1598, %v1629
      %v1631 = vrcp.pop %v1549
      %v1632 = vmul.f32 %v1600, %v1631
      %v1633 = vrcp.pop %v1551
      %v1634 = vmul.f32 %v1602, %v1633
      %v1635 = vrcp.pop %v1553
      %v1636 = vmul.f32 %v1604, %v1635
      %v1637 = vrcp.pop %v1555
      %v1638 = vmul.f32 %v1606, %v1637
      %v1639 = vrcp.pop %v1557
      %v1640 = vmul.f32 %v1608, %v1639
      %v1641 = vrcp.pop %v1559
      %v1642 = vmul.f32 %v1610, %v1641
      %vm1643 = vcmp.eq.s32.totalorder %v1561, 3
      %v1644 = vsel %vm1643, %v1612, %v1480
      %v1645 = vsel %vm1643, %v1614, %v1481
      %v1646 = vsel %vm1643, %v1616, %v1482
      %v1647 = vsel %vm1643, %v1618, %v1483
      %v1648 = vsel %vm1643, %v1620, %v1484
      %v1649 = vsel %vm1643, %v1622, %v1485
      %v1650 = vsel %vm1643, %v1624, %v1486
      %v1651 = vsel %vm1643, %v1626, %v1487
      %v1652 = vsel %vm1643, %v1628, %v1488
      %v1653 = vsel %vm1643, %v1630, %v1489
      %v1654 = vsel %vm1643, %v1632, %v1490
      %v1655 = vsel %vm1643, %v1634, %v1491
      %v1656 = vsel %vm1643, %v1636, %v1492
      %v1657 = vsel %vm1643, %v1638, %v1493
      %v1658 = vsel %vm1643, %v1640, %v1494
      %v1659 = vsel %vm1643, %v1642, %v1495
      %1660 = vst [vmem:[%s280] sm:$0xff] %v1644
      %1661 = vst [vmem:[%s280 + $0x8] sm:$0xff] %v1645
      %1662 = vst [vmem:[%s280 + $0x10] sm:$0xff] %v1646
      %1663 = vst [vmem:[%s280 + $0x18] sm:$0xff] %v1647
      %1664 = vst [vmem:[%s280 + $0x20] sm:$0xff] %v1648
      %1665 = vst [vmem:[%s280 + $0x28] sm:$0xff] %v1649
      %1666 = vst [vmem:[%s280 + $0x30] sm:$0xff] %v1650
      %1667 = vst [vmem:[%s280 + $0x38] sm:$0xff] %v1651
      %1668 = vst [vmem:[%s280 + $0x40] sm:$0xff] %v1652
      %1669 = vst [vmem:[%s280 + $0x48] sm:$0xff] %v1653
      %1670 = vst [vmem:[%s280 + $0x50] sm:$0xff] %v1654
      %1671 = vst [vmem:[%s280 + $0x58] sm:$0xff] %v1655
      %1672 = vst [vmem:[%s280 + $0x60] sm:$0xff] %v1656
      %1673 = vst [vmem:[%s280 + $0x68] sm:$0xff] %v1657
      %1674 = vst [vmem:[%s280 + $0x70] sm:$0xff] %v1658
      %1675 = vst [vmem:[%s280 + $0x78] sm:$0xff] %v1659
      %s1676 = smul.u32 16, %s18
      %p1677 = scmp.lt.s32.totalorder %s1676, 31
      %s1678 = scalar_select %p1677, %s1676, 31
      %s1679 = smul.addr %s1678, 8
      %s1680 = scalar_lea.vmem %s7, %s1679
      // Predicated region
      $region49: #{amd_dnn_plus_forward.1} parent=47 // pred_check
        %p1681 = pneg %p188
      $region50: #{amd_dnn_plus_forward.1} parent=47 // pred_check_branch
        %1683 = sbr.rel (%p1681) target = $region52
      $region51: #{amd_dnn_plus_forward.1} parent=47 // pred_region
        %s1684 = smul.u32 16, %s18
      $region52: #{amd_dnn_plus_forward.1} parent=47 // pred_fallthru
        _
    $region48: #{amd_dnn_plus_forward.1} parent=5 // pred_fallthru
      _
    %p1685 = scmp.le.s32.totalorder 2, %s13
    // Predicated region
    $region53: #{amd_dnn_plus_forward.1} parent=5 // pred_check
      %p1686 = pneg %p1685
    $region54: #{amd_dnn_plus_forward.1} parent=5 // pred_check_branch
      %1688 = sbr.rel (%p1686) target = $region56
    $region55: #{amd_dnn_plus_forward.1} parent=5 // pred_region
      %s1689 = ssub.s32 %s13, 2
      // Predicated region
      $region57: #{amd_dnn_plus_forward.1} parent=55 // pred_check
        %p1690 = pneg %p194
      $region58: #{amd_dnn_plus_forward.1} parent=55 // pred_check_branch
        %1692 = sbr.rel (%p1690) target = $region60
      $region59: #{amd_dnn_plus_forward.1} parent=55 // pred_region
        %s1693 = smul.u32 16, %s19
        %p1694 = scmp.lt.s32.totalorder %s1693, 31
        %s1695 = scalar_select %p1694, %s1693, 31
        %s1696 = smul.addr %s1695, 8
        %s1697 = scalar_lea.vmem %s7, %s1696
      $region60: #{amd_dnn_plus_forward.1} parent=55 // pred_fallthru
        _
    $region56: #{amd_dnn_plus_forward.1} parent=5 // pred_fallthru
      _
  $region6: #{amd_dnn_plus_forward.1} parent=0 // loop_footer
    %s17 = sadd.s32 1, %s13
  $region7: #{amd_dnn_plus_forward.1} parent=0 // loop_footer_branch
    %12 = sbr.rel target = $region3
  $region8: #{amd_dnn_plus_forward.1} parent=0 // loop_exit
    _

</llo_original>
